<compile_context>
chip_gen: v7x
topology: tpu7x:2x2x1
jax: 0.10.0
libtpu: 0.0.40
codegen_flags: <defaults>
</compile_context>

<pallas_src>
import math
import jax
import jax.numpy as jnp
from jax import lax
from jax.experimental import pallas as pl
from jax.experimental.pallas import tpu as pltpu


# ---------------------------------------------------------------------------
# Pallas kernel
# ---------------------------------------------------------------------------
def make_pst_kernel(spatial_cfg, temporal_cfg, BM, K, eps=1e-5):
    """spatial_cfg / temporal_cfg: list of (has_bn, has_act) per MLP layer.

    Grid is (T_out, W), W innermost ("arbitrary").  The temporal-window sum is
    accumulated in an f32 VMEM scratch and written to the output tile once at
    w == W-1.  BatchNorm uses per-invocation batch statistics (PyTorch
    training-mode forward), computed over the B*M*K (spatial) / B*M (temporal)
    rows of the current (t, w) tile — exactly the reduction BatchNorm2d/1d
    performs per call in the torch reference.
    """

    def bn_act(h, gb, inv_n, has_act):
        # Single-pass batch norm: one reduction (sum & sumsq), folded
        # scale/shift, fused ReLU.  All in f32.
        gamma = gb[0:1, :]
        beta = gb[1:2, :]
        s1 = jnp.sum(h, axis=0, keepdims=True)
        s2 = jnp.sum(h * h, axis=0, keepdims=True)
        mean = s1 * inv_n
        var = jnp.maximum(s2 * inv_n - mean * mean, 0.0)
        scale = gamma * lax.rsqrt(var + eps)
        shift = beta - mean * scale
        h = h * scale + shift
        if has_act:
            h = jnp.maximum(h, 0.0)
        return h

    def kernel(*refs):
        x_ref = refs[0]
        out_ref = refs[-2]
        acc_ref = refs[-1]
        params = refs[1:-2]
        p = 0

        widx = pl.program_id(1)
        inv_nk = 1.0 / float(BM * K)
        inv_n = 1.0 / float(BM)

        # ---- spatial MLP (shared across the temporal window) ----
        h = x_ref[0, 0]                                 # (B*M*K, Cin_pad) bf16
        for has_bn, has_act in spatial_cfg:
            w = params[p][...]; p += 1                  # (Cin, Cout) bf16
            h = jnp.dot(h.astype(jnp.bfloat16), w,
                        preferred_element_type=jnp.float32)
            if has_bn:
                gb = params[p][...]; p += 1             # (2, Cout) f32
                h = bn_act(h, gb, inv_nk, has_act)
            elif has_act:
                h = jnp.maximum(h, 0.0)

        # ---- max over the K grouped neighbours ----
        Cs = h.shape[-1]
        h = jnp.max(h.reshape(BM, K, Cs), axis=1)       # (B*M, Cs) f32

        # ---- temporal MLP, one per offset w = program_id(1) ----
        for has_bn, has_act in temporal_cfg:
            w = params[p][widx]; p += 1                 # (Cin, Cout) bf16
            h = jnp.dot(h.astype(jnp.bfloat16), w,
                        preferred_element_type=jnp.float32)
            if has_bn:
                gb = params[p][widx]; p += 1            # (2, Cout) f32
                h = bn_act(h, gb, inv_n, has_act)
            elif has_act:
                h = jnp.maximum(h, 0.0)

        # ---- accumulate the temporal-window sum in f32 VMEM scratch ----
        @pl.when(widx == 0)
        def _():
            acc_ref[...] = h

        @pl.when(widx != 0)
        def _():
            acc_ref[...] = acc_ref[...] + h

        # ---- single, lane-dense writeback at the last offset ----
        @pl.when(widx == pl.num_programs(1) - 1)
        def _():
            out_ref[0] = jnp.transpose(acc_ref[...]).astype(out_ref.dtype)

    return kernel


# ---------------------------------------------------------------------------
# Plain-JAX glue (data-dependent index construction, same semantics as
# pointnet2_utils CUDA ops)
# ---------------------------------------------------------------------------
def furthest_point_sample(xyz, m):
    """xyz: (B, N, 3) -> (B, m) int32.  Mirrors pointnet2 FPS (starts at idx 0)."""
    N = xyz.shape[1]

    def single(pts):
        def body(i, state):
            idxs, dists, last = state
            d = jnp.sum(jnp.square(pts - pts[last]), axis=-1)
            dists = jnp.minimum(dists, d)
            nxt = jnp.argmax(dists).astype(jnp.int32)
            return idxs.at[i].set(nxt), dists, nxt

        idxs = jnp.zeros((m,), jnp.int32)
        dists = jnp.full((N,), 1e10, jnp.float32)
        idxs, _, _ = lax.fori_loop(1, m, body, (idxs, dists, jnp.int32(0)))
        return idxs

    return jax.vmap(single)(xyz)


def ball_query(radius, K, xyz, new_xyz):
    """xyz: (B, N, 3), new_xyz: (B, M, 3) -> (B, M, K) int32.

    Matches pointnet2 ball_query: first K point indices with d^2 < r^2 (in
    index order); remaining slots filled with the first found index.
    """
    N = xyz.shape[1]

    def single(pts, anchors):
        def per_anchor(a):
            d2 = jnp.sum(jnp.square(pts - a), axis=-1)
            within = d2 < radius * radius
            ar = jnp.arange(N, dtype=jnp.int32)
            keys = jnp.where(within, ar, N + ar)
            order = jnp.argsort(keys).astype(jnp.int32)
            cnt = jnp.sum(within.astype(jnp.int32))
            first = jnp.where(cnt > 0, order[0], jnp.int32(0))
            slots = jnp.arange(K, dtype=jnp.int32)
            return jnp.where(slots < cnt, order[:K], first)

        return jax.vmap(per_anchor)(anchors)

    return jax.vmap(single)(xyz, new_xyz)


def grouping_operation(features, idx):
    """features: (B, C, N), idx: (B, M, K) -> (B, C, M, K)."""
    def single(f, ind):
        return jnp.take(f, ind, axis=1)

    return jax.vmap(single)(features, idx)


# ---------------------------------------------------------------------------
# Parameters (deterministic init; conv 1x1 weights stored transposed (Cin,Cout))
# ---------------------------------------------------------------------------
def init_params(key, cfg):
    sp_ch = cfg["spatial_channels"]
    tp_ch = cfg["temporal_channels"]
    W = 2 * cfg["temporal_radius"] + 1
    params = {"spatial_w": [], "spatial_gamma": [], "spatial_beta": [],
              "temporal_w": [], "temporal_gamma": [], "temporal_beta": []}

    ci = 3 + cfg["in_channels"]
    for co in sp_ch:
        key, k1 = jax.random.split(key)
        bound = 1.0 / math.sqrt(ci)
        params["spatial_w"].append(
            jax.random.uniform(k1, (ci, co), jnp.float32, -bound, bound))
        params["spatial_gamma"].append(jnp.ones((1, co), jnp.float32))
        params["spatial_beta"].append(jnp.zeros((1, co), jnp.float32))
        ci = co

    for li, co in enumerate(tp_ch):
        ci = sp_ch[-1] if li == 0 else tp_ch[li - 1]
        ws = []
        for _ in range(W):
            key, k1 = jax.random.split(key)
            bound = 1.0 / math.sqrt(ci)
            ws.append(jax.random.uniform(k1, (ci, co), jnp.float32, -bound, bound))
        params["temporal_w"].append(jnp.stack(ws))                 # (W, ci, co)
        params["temporal_gamma"].append(jnp.ones((W, 1, co), jnp.float32))
        params["temporal_beta"].append(jnp.zeros((W, 1, co), jnp.float32))
    return params


# ---------------------------------------------------------------------------
# PSTOp forward
# ---------------------------------------------------------------------------
def pst_op_forward(xyzs, features, params, cfg):
    B, L, N, _ = xyzs.shape
    r = cfg["temporal_radius"]
    W = 2 * r + 1
    stride = cfg["temporal_stride"]
    pad = cfg["temporal_padding"]
    M = N // cfg["spatial_sampling"]
    K = cfg["spatial_neighbours"]
    radius = cfg["spatial_radius"]
    Cin_sp = 3 + cfg["in_channels"]
    Cin_pad = ((Cin_sp + 7) // 8) * 8          # pad channel dim to a sublane group

    if r > 0 and stride > 1:
        assert (L + sum(pad) - (2 * r + 1)) % stride == 0

    frames_xyz = [xyzs[:, l] for l in range(L)]
    frames_feat = [features[:, l] for l in range(L)] if cfg["in_channels"] else None

    if cfg["temporal_padding_mode"] == "zeros":
        zx = jnp.zeros_like(frames_xyz[0])
        frames_xyz = [zx] * pad[0] + frames_xyz + [zx] * pad[1]
        if frames_feat is not None:
            zf = jnp.zeros_like(frames_feat[0])
            frames_feat = [zf] * pad[0] + frames_feat + [zf] * pad[1]
    else:  # replicate
        frames_xyz = [frames_xyz[0]] * pad[0] + frames_xyz + [frames_xyz[-1]] * pad[1]
        if frames_feat is not None:
            frames_feat = ([frames_feat[0]] * pad[0] + frames_feat
                           + [frames_feat[-1]] * pad[1])

    Lp = len(frames_xyz)
    ts = list(range(r, Lp - r, stride))
    T_out = len(ts)

    # TODO(synk): the gathered `grouped` slab is still materialized in HBM by
    # XLA; an in-kernel gather via scalar-prefetched ball-query indices would
    # roughly halve HBM traffic at realistic sizes.
    grouped = []
    new_xyzs = []
    for t in ts:
        anchor_idx = furthest_point_sample(frames_xyz[t], M)                    # (B, M)
        anchor_xyz = jnp.take_along_axis(frames_xyz[t], anchor_idx[..., None],
                                         axis=1)                                # (B, M, 3)
        new_xyzs.append(anchor_xyz)
        for i in range(t - r, t + r + 1):
            nb_xyz = frames_xyz[i]
            idx = ball_query(radius, K, nb_xyz, anchor_xyz)                     # (B, M, K)
            nb_grouped = grouping_operation(jnp.transpose(nb_xyz, (0, 2, 1)), idx)
            disp = nb_grouped - jnp.transpose(anchor_xyz, (0, 2, 1))[..., None]  # (B,3,M,K)
            if frames_feat is not None:
                feat_grouped = grouping_operation(frames_feat[i], idx)          # (B,C,M,K)
                sf = jnp.concatenate([disp, feat_grouped], axis=1)
            else:
                sf = disp
            sf = jnp.transpose(sf, (0, 2, 3, 1)).reshape(B * M * K, Cin_sp)
            grouped.append(sf)

    grouped = jnp.stack(grouped).reshape(T_out, W, B * M * K, Cin_sp)
    if Cin_pad != Cin_sp:
        grouped = jnp.pad(grouped, ((0, 0), (0, 0), (0, 0), (0, Cin_pad - Cin_sp)))
    grouped = grouped.astype(jnp.bfloat16)   # bf16 MXU operands; f32 accumulation

    spatial_cfg = list(zip(cfg["spatial_batch_norm"], cfg["spatial_activation"]))
    temporal_cfg = list(zip(cfg["temporal_batch_norm"], cfg["temporal_activation"]))
    kernel = make_pst_kernel(spatial_cfg, temporal_cfg, B * M, K)

    # ---- parameter prep: bf16 weights, padded first layer, packed gamma/beta
    # TODO(synk): in eval mode the BN running stats could be folded into the
    # conv weights/bias and the in-kernel reductions dropped; here we keep
    # training-mode batch statistics to match the reference's default forward.
    sp_w = [w.astype(jnp.bfloat16) for w in params["spatial_w"]]
    if Cin_pad != Cin_sp:
        sp_w[0] = jnp.pad(sp_w[0], ((0, Cin_pad - Cin_sp), (0, 0)))
    sp_gb = [jnp.concatenate([g, b], axis=0)                    # (2, C)
             for g, b in zip(params["spatial_gamma"], params["spatial_beta"])]
    tp_w = [w.astype(jnp.bfloat16) for w in params["temporal_w"]]   # (W, Cin, Cout)
    tp_gb = [jnp.concatenate([g, b], axis=1)                    # (W, 2, C)
             for g, b in zip(params["temporal_gamma"], params["temporal_beta"])]

    inputs = [grouped]
    in_specs = [pl.BlockSpec((1, 1, B * M * K, Cin_pad), lambda t, w: (t, w, 0, 0))]

    def resident_spec(arr):
        nd = arr.ndim
        return pl.BlockSpec(arr.shape, lambda t, w, _nd=nd: (0,) * _nd)

    for li, (has_bn, _) in enumerate(spatial_cfg):
        inputs.append(sp_w[li]); in_specs.append(resident_spec(sp_w[li]))
        if has_bn:
            inputs.append(sp_gb[li]); in_specs.append(resident_spec(sp_gb[li]))

    for li, (has_bn, _) in enumerate(temporal_cfg):
        # whole (W, Cin, Cout) stack stays VMEM-resident; indexed by program_id(1)
        inputs.append(tp_w[li]); in_specs.append(resident_spec(tp_w[li]))
        if has_bn:
            inputs.append(tp_gb[li]); in_specs.append(resident_spec(tp_gb[li]))

    Ct = cfg["temporal_channels"][-1]

    # explicit scoped-VMEM budget sized from the actual tiles (clamped so it
    # also fits v7x's 64 MiB physical VMEM with headroom)
    bmk = B * M * K
    max_c = max([Cin_pad] + list(cfg["spatial_channels"]) + list(cfg["temporal_channels"]))
    est = (bmk * Cin_pad * 2 * 2            # bf16 input tile, double-buffered
           + bmk * max_c * 4 * 3            # f32 intermediates + BN temps
           + Ct * B * M * 4 * 2             # output tile, double-buffered
           + B * M * Ct * 4                 # f32 accumulator scratch
           + 2 * sum(int(a.size) * a.dtype.itemsize for a in inputs[1:])
           + (4 << 20))
    vmem_limit = int(min(max(est, 16 << 20), 48 << 20))

    # TODO(synk): row-tiling of the B*M*K axis (with a two-pass / running-sum
    # BatchNorm across row tiles) is not implemented; the whole (B*M*K, C)
    # tile stays resident per (t, w) step, which limits the maximum B*M*K.
    out = pl.pallas_call(
        kernel,
        out_shape=jax.ShapeDtypeStruct((T_out, Ct, B * M), jnp.float32),
        grid=(T_out, W),
        in_specs=in_specs,
        out_specs=pl.BlockSpec((1, Ct, B * M), lambda t, w: (t, 0, 0)),
        scratch_shapes=[pltpu.VMEM((B * M, Ct), jnp.float32)],
        compiler_params=pltpu.CompilerParams(
            dimension_semantics=("parallel", "arbitrary"),
            vmem_limit_bytes=vmem_limit),
    )(*inputs)

    # out: (T_out, Ct, B*M) with columns ordered b-major -> (B, T_out, Ct, M)
    new_features = jnp.transpose(out.reshape(T_out, Ct, B, M), (2, 0, 1, 3))
    new_xyzs = jnp.transpose(jnp.stack(new_xyzs), (1, 0, 2, 3))               # (B,T,M,3)
    return new_xyzs, new_features


# ---------------------------------------------------------------------------
if __name__ == "__main__":
    cfg = dict(
        in_channels=4,
        spatial_radius=0.9,
        spatial_neighbours=8,
        spatial_sampling=2,
        spatial_channels=[32, 64],
        spatial_batch_norm=[True, True],
        spatial_activation=[True, True],
        temporal_radius=1,
        temporal_stride=1,
        temporal_padding=[1, 1],
        temporal_padding_mode="replicate",
        temporal_channels=[64],
        temporal_batch_norm=[True],
        temporal_activation=[True],
    )
    B, L, N = 2, 4, 16
    key = jax.random.PRNGKey(0)
    kx, kf, kp = jax.random.split(key, 3)
    xyzs = jax.random.uniform(kx, (B, L, N, 3), jnp.float32)
    features = jax.random.normal(kf, (B, L, cfg["in_channels"], N), jnp.float32)
    params = init_params(kp, cfg)

    new_xyzs, new_features = pst_op_forward(xyzs, features, params, cfg)
    jax.block_until_ready((new_xyzs, new_features))

    T_out = (L + sum(cfg["temporal_padding"])
             - 2 * cfg["temporal_radius"] - 1) // cfg["temporal_stride"] + 1
    M = N // cfg["spatial_sampling"]
    assert new_xyzs.shape == (B, T_out, M, 3)
    assert new_features.shape == (B, T_out, cfg["temporal_channels"][-1], M)
    assert bool(jnp.all(jnp.isfinite(new_features)))
    # TODO(synk): FPS skips points with |p|^2 <= 1e-3 in the original CUDA op;
    # that padding-hack edge case is not replicated here.
    print("KERNEL_OK")
</pallas_src>

<mosaic_0001>
module attributes {stable_mosaic.version = 11 : i64} {
  func.func @kernel(%arg0: i32, %arg1: i32, %arg2: memref<1x1x128x8xbf16, #tpu.memory_space<vmem>>, %arg3: memref<8x32xbf16, #tpu.memory_space<vmem>>, %arg4: memref<2x32xf32, #tpu.memory_space<vmem>>, %arg5: memref<32x64xbf16, #tpu.memory_space<vmem>>, %arg6: memref<2x64xf32, #tpu.memory_space<vmem>>, %arg7: memref<3x64x64xbf16, #tpu.memory_space<vmem>>, %arg8: memref<3x2x64xf32, #tpu.memory_space<vmem>>, %arg9: memref<1x64x16xf32, #tpu.memory_space<vmem>>, %arg10: memref<16x64xf32, #tpu.memory_space<vmem>>) attributes {dimension_semantics = [#tpu.dimension_semantics<parallel>, #tpu.dimension_semantics<arbitrary>], iteration_bounds = array<i64: 4, 3>, scalar_prefetch = 0 : i64, scratch_operands = 1 : i64, tpu.core_type = #tpu.core_type<tc>, window_params = [{transform_indices = @transform_0, window_bounds = array<i64: 1, 1, 128, 8>}, {pipeline_mode = #tpu.pipeline_mode<synchronous>, transform_indices = @transform_1, window_bounds = array<i64: 8, 32>}, {pipeline_mode = #tpu.pipeline_mode<synchronous>, transform_indices = @transform_2, window_bounds = array<i64: 2, 32>}, {pipeline_mode = #tpu.pipeline_mode<synchronous>, transform_indices = @transform_3, window_bounds = array<i64: 32, 64>}, {pipeline_mode = #tpu.pipeline_mode<synchronous>, transform_indices = @transform_4, window_bounds = array<i64: 2, 64>}, {pipeline_mode = #tpu.pipeline_mode<synchronous>, transform_indices = @transform_5, window_bounds = array<i64: 3, 64, 64>}, {pipeline_mode = #tpu.pipeline_mode<synchronous>, transform_indices = @transform_6, window_bounds = array<i64: 3, 2, 64>}, {transform_indices = @transform_7, window_bounds = array<i64: 1, 64, 16>}]} {
    %c0 = arith.constant 0 : index
    %c0_0 = arith.constant 0 : index
    %c0_1 = arith.constant 0 : index
    %c0_2 = arith.constant 0 : index
    %0 = vector.load %arg2[%c0, %c0_0, %c0_1, %c0_2] : memref<1x1x128x8xbf16, #tpu.memory_space<vmem>>, vector<1x1x128x8xbf16>
    %1 = vector.shape_cast %0 : vector<1x1x128x8xbf16> to vector<128x8xbf16>
    %c0_3 = arith.constant 0 : index
    %c0_4 = arith.constant 0 : index
    %2 = vector.load %arg3[%c0_3, %c0_4] : memref<8x32xbf16, #tpu.memory_space<vmem>>, vector<8x32xbf16>
    %cst = arith.constant dense<0.000000e+00> : vector<128x32xf32>
    %3 = tpu.matmul %1, %2, %cst {dimension_numbers = #tpu.dot_dimension_numbers<[1], [0], [0], [1], [0, 0, 1, 1], [], []>} : vector<128x8xbf16>, vector<8x32xbf16>, vector<128x32xf32> -> vector<128x32xf32>
    %c0_5 = arith.constant 0 : index
    %c0_6 = arith.constant 0 : index
    %4 = vector.load %arg4[%c0_5, %c0_6] : memref<2x32xf32, #tpu.memory_space<vmem>>, vector<2x32xf32>
    %5 = vector.extract_strided_slice %4 {offsets = [0, 0], sizes = [1, 32], strides = [1, 1]} : vector<2x32xf32> to vector<1x32xf32>
    %6 = vector.extract_strided_slice %4 {offsets = [1, 0], sizes = [1, 32], strides = [1, 1]} : vector<2x32xf32> to vector<1x32xf32>
    %cst_7 = arith.constant dense<0.000000e+00> : vector<32xf32>
    %7 = vector.multi_reduction <add>, %3, %cst_7 [0] : vector<128x32xf32> to vector<32xf32>
    %8 = vector.shape_cast %7 : vector<32xf32> to vector<1x32xf32>
    %9 = arith.mulf %3, %3 : vector<128x32xf32>
    %cst_8 = arith.constant dense<0.000000e+00> : vector<32xf32>
    %10 = vector.multi_reduction <add>, %9, %cst_8 [0] : vector<128x32xf32> to vector<32xf32>
    %11 = vector.shape_cast %10 : vector<32xf32> to vector<1x32xf32>
    %cst_9 = arith.constant 7.812500e-03 : f32
    %12 = vector.broadcast %cst_9 : f32 to vector<1x32xf32>
    %13 = arith.mulf %8, %12 : vector<1x32xf32>
    %cst_10 = arith.constant 7.812500e-03 : f32
    %14 = vector.broadcast %cst_10 : f32 to vector<1x32xf32>
    %15 = arith.mulf %11, %14 : vector<1x32xf32>
    %16 = arith.mulf %13, %13 : vector<1x32xf32>
    %17 = arith.subf %15, %16 : vector<1x32xf32>
    %cst_11 = arith.constant 0.000000e+00 : f32
    %18 = vector.broadcast %cst_11 : f32 to vector<1x32xf32>
    %19 = arith.maximumf %17, %18 : vector<1x32xf32>
    %cst_12 = arith.constant 9.99999974E-6 : f32
    %20 = vector.broadcast %cst_12 : f32 to vector<1x32xf32>
    %21 = arith.addf %19, %20 : vector<1x32xf32>
    %22 = math.rsqrt %21 : vector<1x32xf32>
    %23 = arith.mulf %5, %22 : vector<1x32xf32>
    %24 = arith.mulf %13, %23 : vector<1x32xf32>
    %25 = arith.subf %6, %24 : vector<1x32xf32>
    %26 = vector.broadcast %23 : vector<1x32xf32> to vector<128x32xf32>
    %27 = arith.mulf %3, %26 : vector<128x32xf32>
    %28 = vector.broadcast %25 : vector<1x32xf32> to vector<128x32xf32>
    %29 = arith.addf %27, %28 : vector<128x32xf32>
    %cst_13 = arith.constant 0.000000e+00 : f32
    %30 = vector.broadcast %cst_13 : f32 to vector<128x32xf32>
    %31 = arith.maximumf %29, %30 : vector<128x32xf32>
    %c0_14 = arith.constant 0 : index
    %c0_15 = arith.constant 0 : index
    %32 = vector.load %arg5[%c0_14, %c0_15] : memref<32x64xbf16, #tpu.memory_space<vmem>>, vector<32x64xbf16>
    %33 = arith.truncf %31 : vector<128x32xf32> to vector<128x32xbf16>
    %cst_16 = arith.constant dense<0.000000e+00> : vector<128x64xf32>
    %34 = tpu.matmul %33, %32, %cst_16 {dimension_numbers = #tpu.dot_dimension_numbers<[1], [0], [0], [1], [0, 0, 1, 1], [], []>} : vector<128x32xbf16>, vector<32x64xbf16>, vector<128x64xf32> -> vector<128x64xf32>
    %c0_17 = arith.constant 0 : index
    %c0_18 = arith.constant 0 : index
    %35 = vector.load %arg6[%c0_17, %c0_18] : memref<2x64xf32, #tpu.memory_space<vmem>>, vector<2x64xf32>
    %36 = vector.extract_strided_slice %35 {offsets = [0, 0], sizes = [1, 64], strides = [1, 1]} : vector<2x64xf32> to vector<1x64xf32>
    %37 = vector.extract_strided_slice %35 {offsets = [1, 0], sizes = [1, 64], strides = [1, 1]} : vector<2x64xf32> to vector<1x64xf32>
    %cst_19 = arith.constant dense<0.000000e+00> : vector<64xf32>
    %38 = vector.multi_reduction <add>, %34, %cst_19 [0] : vector<128x64xf32> to vector<64xf32>
    %39 = vector.shape_cast %38 : vector<64xf32> to vector<1x64xf32>
    %40 = arith.mulf %34, %34 : vector<128x64xf32>
    %cst_20 = arith.constant dense<0.000000e+00> : vector<64xf32>
    %41 = vector.multi_reduction <add>, %40, %cst_20 [0] : vector<128x64xf32> to vector<64xf32>
    %42 = vector.shape_cast %41 : vector<64xf32> to vector<1x64xf32>
    %cst_21 = arith.constant 7.812500e-03 : f32
    %43 = vector.broadcast %cst_21 : f32 to vector<1x64xf32>
    %44 = arith.mulf %39, %43 : vector<1x64xf32>
    %cst_22 = arith.constant 7.812500e-03 : f32
    %45 = vector.broadcast %cst_22 : f32 to vector<1x64xf32>
    %46 = arith.mulf %42, %45 : vector<1x64xf32>
    %47 = arith.mulf %44, %44 : vector<1x64xf32>
    %48 = arith.subf %46, %47 : vector<1x64xf32>
    %cst_23 = arith.constant 0.000000e+00 : f32
    %49 = vector.broadcast %cst_23 : f32 to vector<1x64xf32>
    %50 = arith.maximumf %48, %49 : vector<1x64xf32>
    %cst_24 = arith.constant 9.99999974E-6 : f32
    %51 = vector.broadcast %cst_24 : f32 to vector<1x64xf32>
    %52 = arith.addf %50, %51 : vector<1x64xf32>
    %53 = math.rsqrt %52 : vector<1x64xf32>
    %54 = arith.mulf %36, %53 : vector<1x64xf32>
    %55 = arith.mulf %44, %54 : vector<1x64xf32>
    %56 = arith.subf %37, %55 : vector<1x64xf32>
    %57 = vector.broadcast %54 : vector<1x64xf32> to vector<128x64xf32>
    %58 = arith.mulf %34, %57 : vector<128x64xf32>
    %59 = vector.broadcast %56 : vector<1x64xf32> to vector<128x64xf32>
    %60 = arith.addf %58, %59 : vector<128x64xf32>
    %cst_25 = arith.constant 0.000000e+00 : f32
    %61 = vector.broadcast %cst_25 : f32 to vector<128x64xf32>
    %62 = arith.maximumf %60, %61 : vector<128x64xf32>
    %63 = vector.shape_cast %62 : vector<128x64xf32> to vector<16x8x64xf32>
    %cst_26 = arith.constant dense<0xFF800000> : vector<16x64xf32>
    %64 = vector.multi_reduction <maximumf>, %63, %cst_26 [1] : vector<16x8x64xf32> to vector<16x64xf32>
    %65 = arith.index_cast %arg1 : i32 to index
    %c0_27 = arith.constant 0 : index
    %c0_28 = arith.constant 0 : index
    %66 = vector.load %arg7[%65, %c0_27, %c0_28] : memref<3x64x64xbf16, #tpu.memory_space<vmem>>, vector<1x64x64xbf16>
    %67 = vector.shape_cast %66 : vector<1x64x64xbf16> to vector<64x64xbf16>
    %68 = arith.truncf %64 : vector<16x64xf32> to vector<16x64xbf16>
    %cst_29 = arith.constant dense<0.000000e+00> : vector<16x64xf32>
    %69 = tpu.matmul %68, %67, %cst_29 {dimension_numbers = #tpu.dot_dimension_numbers<[1], [0], [0], [1], [0, 0, 1, 1], [], []>} : vector<16x64xbf16>, vector<64x64xbf16>, vector<16x64xf32> -> vector<16x64xf32>
    %70 = arith.index_cast %arg1 : i32 to index
    %c0_30 = arith.constant 0 : index
    %c0_31 = arith.constant 0 : index
    %71 = vector.load %arg8[%70, %c0_30, %c0_31] : memref<3x2x64xf32, #tpu.memory_space<vmem>>, vector<1x2x64xf32>
    %72 = vector.shape_cast %71 : vector<1x2x64xf32> to vector<2x64xf32>
    %73 = vector.extract_strided_slice %72 {offsets = [0, 0], sizes = [1, 64], strides = [1, 1]} : vector<2x64xf32> to vector<1x64xf32>
    %74 = vector.extract_strided_slice %72 {offsets = [1, 0], sizes = [1, 64], strides = [1, 1]} : vector<2x64xf32> to vector<1x64xf32>
    %cst_32 = arith.constant dense<0.000000e+00> : vector<64xf32>
    %75 = vector.multi_reduction <add>, %69, %cst_32 [0] : vector<16x64xf32> to vector<64xf32>
    %76 = vector.shape_cast %75 : vector<64xf32> to vector<1x64xf32>
    %77 = arith.mulf %69, %69 : vector<16x64xf32>
    %cst_33 = arith.constant dense<0.000000e+00> : vector<64xf32>
    %78 = vector.multi_reduction <add>, %77, %cst_33 [0] : vector<16x64xf32> to vector<64xf32>
    %79 = vector.shape_cast %78 : vector<64xf32> to vector<1x64xf32>
    %cst_34 = arith.constant 6.250000e-02 : f32
    %80 = vector.broadcast %cst_34 : f32 to vector<1x64xf32>
    %81 = arith.mulf %76, %80 : vector<1x64xf32>
    %cst_35 = arith.constant 6.250000e-02 : f32
    %82 = vector.broadcast %cst_35 : f32 to vector<1x64xf32>
    %83 = arith.mulf %79, %82 : vector<1x64xf32>
    %84 = arith.mulf %81, %81 : vector<1x64xf32>
    %85 = arith.subf %83, %84 : vector<1x64xf32>
    %cst_36 = arith.constant 0.000000e+00 : f32
    %86 = vector.broadcast %cst_36 : f32 to vector<1x64xf32>
    %87 = arith.maximumf %85, %86 : vector<1x64xf32>
    %cst_37 = arith.constant 9.99999974E-6 : f32
    %88 = vector.broadcast %cst_37 : f32 to vector<1x64xf32>
    %89 = arith.addf %87, %88 : vector<1x64xf32>
    %90 = math.rsqrt %89 : vector<1x64xf32>
    %91 = arith.mulf %73, %90 : vector<1x64xf32>
    %92 = arith.mulf %81, %91 : vector<1x64xf32>
    %93 = arith.subf %74, %92 : vector<1x64xf32>
    %94 = vector.broadcast %91 : vector<1x64xf32> to vector<16x64xf32>
    %95 = arith.mulf %69, %94 : vector<16x64xf32>
    %96 = vector.broadcast %93 : vector<1x64xf32> to vector<16x64xf32>
    %97 = arith.addf %95, %96 : vector<16x64xf32>
    %cst_38 = arith.constant 0.000000e+00 : f32
    %98 = vector.broadcast %cst_38 : f32 to vector<16x64xf32>
    %99 = arith.maximumf %97, %98 : vector<16x64xf32>
    %c0_i32 = arith.constant 0 : i32
    %100 = arith.cmpi eq, %arg1, %c0_i32 : i32
    %101 = arith.extui %100 : i1 to i32
    %c0_i32_39 = arith.constant 0 : i32
    %102 = arith.cmpi ne, %101, %c0_i32_39 : i32
    scf.if %102 {
      %c0_43 = arith.constant 0 : index
      %c0_44 = arith.constant 0 : index
      %109 = vector.load %arg10[%c0_43, %c0_44] : memref<16x64xf32, #tpu.memory_space<vmem>>, vector<16x64xf32>
      tpu.vector_store %arg10[%c0_43, %c0_44], %99 {strides = array<i32>} : memref<16x64xf32, #tpu.memory_space<vmem>>, vector<16x64xf32>,
    } else {
    }
    %c0_i32_40 = arith.constant 0 : i32
    %103 = arith.cmpi ne, %arg1, %c0_i32_40 : i32
    %104 = arith.extui %103 : i1 to i32
    %c0_i32_41 = arith.constant 0 : i32
    %105 = arith.cmpi ne, %104, %c0_i32_41 : i32
    scf.if %105 {
      %c0_43 = arith.constant 0 : index
      %c0_44 = arith.constant 0 : index
      %109 = vector.load %arg10[%c0_43, %c0_44] : memref<16x64xf32, #tpu.memory_space<vmem>>, vector<16x64xf32>
      %110 = arith.addf %109, %99 : vector<16x64xf32>
      %c0_45 = arith.constant 0 : index
      %c0_46 = arith.constant 0 : index
      %111 = vector.load %arg10[%c0_45, %c0_46] : memref<16x64xf32, #tpu.memory_space<vmem>>, vector<16x64xf32>
      tpu.vector_store %arg10[%c0_45, %c0_46], %110 {strides = array<i32>} : memref<16x64xf32, #tpu.memory_space<vmem>>, vector<16x64xf32>,
    } else {
    }
    %c2_i32 = arith.constant 2 : i32
    %106 = arith.cmpi eq, %arg1, %c2_i32 : i32
    %107 = arith.extui %106 : i1 to i32
    %c0_i32_42 = arith.constant 0 : i32
    %108 = arith.cmpi ne, %107, %c0_i32_42 : i32
    scf.if %108 {
      %c0_43 = arith.constant 0 : index
      %c0_44 = arith.constant 0 : index
      %109 = vector.load %arg10[%c0_43, %c0_44] : memref<16x64xf32, #tpu.memory_space<vmem>>, vector<16x64xf32>
      %110 = tpu.transpose %109, [1, 0] : vector<16x64xf32> -> vector<64x16xf32>
      %c0_45 = arith.constant 0 : index
      %c0_46 = arith.constant 0 : index
      %c0_47 = arith.constant 0 : index
      %111 = vector.load %arg9[%c0_45, %c0_46, %c0_47] : memref<1x64x16xf32, #tpu.memory_space<vmem>>, vector<1x64x16xf32>
      %112 = vector.shape_cast %111 : vector<1x64x16xf32> to vector<64x16xf32>
      %113 = vector.shape_cast %110 : vector<64x16xf32> to vector<1x64x16xf32>
      tpu.vector_store %arg9[%c0_45, %c0_46, %c0_47], %113 {strides = array<i32>} : memref<1x64x16xf32, #tpu.memory_space<vmem>>, vector<1x64x16xf32>,
    } else {
    }
    return
  }
  func.func @transform_0(%arg0: i32, %arg1: i32) -> (i32, i32, i32, i32) {
    %c0_i32 = arith.constant 0 : i32
    %c0_i32_0 = arith.constant 0 : i32
    %c0_i32_1 = arith.constant 0 : i32
    return %arg0, %arg1, %c0_i32, %c0_i32_0 : i32, i32, i32, i32
  }
  func.func @transform_1(%arg0: i32, %arg1: i32) -> (i32, i32) {
    %c0_i32 = arith.constant 0 : i32
    %c0_i32_0 = arith.constant 0 : i32
    %c0_i32_1 = arith.constant 0 : i32
    return %c0_i32, %c0_i32_0 : i32, i32
  }
  func.func @transform_2(%arg0: i32, %arg1: i32) -> (i32, i32) {
    %c0_i32 = arith.constant 0 : i32
    %c0_i32_0 = arith.constant 0 : i32
    %c0_i32_1 = arith.constant 0 : i32
    return %c0_i32, %c0_i32_0 : i32, i32
  }
  func.func @transform_3(%arg0: i32, %arg1: i32) -> (i32, i32) {
    %c0_i32 = arith.constant 0 : i32
    %c0_i32_0 = arith.constant 0 : i32
    %c0_i32_1 = arith.constant 0 : i32
    return %c0_i32, %c0_i32_0 : i32, i32
  }
  func.func @transform_4(%arg0: i32, %arg1: i32) -> (i32, i32) {
    %c0_i32 = arith.constant 0 : i32
    %c0_i32_0 = arith.constant 0 : i32
    %c0_i32_1 = arith.constant 0 : i32
    return %c0_i32, %c0_i32_0 : i32, i32
  }
  func.func @transform_5(%arg0: i32, %arg1: i32) -> (i32, i32, i32) {
    %c0_i32 = arith.constant 0 : i32
    %c0_i32_0 = arith.constant 0 : i32
    %c0_i32_1 = arith.constant 0 : i32
    %c0_i32_2 = arith.constant 0 : i32
    return %c0_i32, %c0_i32_0, %c0_i32_1 : i32, i32, i32
  }
  func.func @transform_6(%arg0: i32, %arg1: i32) -> (i32, i32, i32) {
    %c0_i32 = arith.constant 0 : i32
    %c0_i32_0 = arith.constant 0 : i32
    %c0_i32_1 = arith.constant 0 : i32
    %c0_i32_2 = arith.constant 0 : i32
    return %c0_i32, %c0_i32_0, %c0_i32_1 : i32, i32, i32
  }
  func.func @transform_7(%arg0: i32, %arg1: i32) -> (i32, i32, i32) {
    %c0_i32 = arith.constant 0 : i32
    %c0_i32_0 = arith.constant 0 : i32
    %c0_i32_1 = arith.constant 0 : i32
    return %arg0, %c0_i32, %c0_i32_0 : i32, i32, i32
  }
}

</mosaic_0001>

<llo_original>
// kernel: tpu_custom_call.1
$region0: #{tpu_custom_call.1}
  #allocation0 [shape = 'u32[]', space=smem, size = 0x4, offset = 0x4, fixed_abs, tag = 'smem constant byte address 0x4 - core index']
  #allocation1 [shape = 'u32[144,128]{1,0:T(1,128)}', space=vmem, size = 0x12000, scoped, tag = 'internal scratch']
  #allocation2 [shape = 'f32[16,64]{1,0:T(8,128)}', space=vmem, size = 0x2000, scoped, tag = 'scratch operand']
  %s0 = inlined_call_operand.vmem [shape: bf16[4,3,128,8], index: 0, kind: input, shape index: {}]
  %s1 = inlined_call_operand.vmem [shape: bf16[8,32], index: 1, kind: input, shape index: {}]
  %s2 = inlined_call_operand.vmem [shape: f32[2,32], index: 2, kind: input, shape index: {}]
  %s3 = inlined_call_operand.vmem [shape: bf16[32,64], index: 3, kind: input, shape index: {}]
  %s4 = inlined_call_operand.vmem [shape: f32[2,64], index: 4, kind: input, shape index: {}]
  %s5 = inlined_call_operand.vmem [shape: bf16[3,64,64], index: 5, kind: input, shape index: {}]
  %s6 = inlined_call_operand.vmem [shape: f32[3,2,64], index: 6, kind: input, shape index: {}]
  %s7 = inlined_call_operand.vmem [shape: f32[4,64,16], index: 7, kind: output, shape index: {}]
  %s8 = sld [smem:[#allocation0]]
  $region73: #{tpu_custom_call.1} parent=0
    _
  %s10 = ssub.s32 1, %s8
  %s11 = scalar_select 0, %s10, %s8
  loop: start=0, step=1, limit=14
  $region2: #{tpu_custom_call.1} parent=0 // loop_pre_header
    _
  $region3: #{tpu_custom_call.1} parent=0 // loop_header
    %s13 = sphi 0, %s17
    %p14 = scmp.ge.s32.totalorder %s13, 14
    %s20 = sphi 0, %s32
    %s21 = sphi 0, %s28
    %s22 = sphi 0, %s20
    %s23 = sphi 0, %s21
    %s24 = sphi 0, %s22
    %s25 = sphi 0, %s23
    %s37 = sphi 0, %s39
    %s40 = sphi 0, %s37
    %s41 = sphi 0, %s40
    %s57 = sphi 0, %s41
    %s61 = sphi 0, %s61
    %s63 = sphi 0, %s61
    %s64 = sphi 0, %s63
    %s78 = sphi 0, %s64
    %s82 = sphi 0, %s82
    %s84 = sphi 0, %s82
    %s85 = sphi 0, %s84
    %s99 = sphi 0, %s85
    %s103 = sphi 0, %s103
    %s105 = sphi 0, %s103
    %s106 = sphi 0, %s105
    %s120 = sphi 0, %s106
    %s124 = sphi 0, %s124
    %s126 = sphi 0, %s124
    %s127 = sphi 0, %s126
    %s141 = sphi 0, %s127
    %s145 = sphi 0, %s145
    %s147 = sphi 0, %s145
    %s148 = sphi 0, %s147
    %s162 = sphi 0, %s148
    %s166 = sphi 0, %s166
    %s168 = sphi 0, %s166
    %s169 = sphi 0, %s168
    %s183 = sphi 0, %s169
    %s189 = sphi 0, %s191
    %s192 = sphi 0, %s189
    %s193 = sphi 0, %s192
    %s209 = sphi 0, %s193
  $region4: #{tpu_custom_call.1} parent=0 // loop_header_branch
    %16 = sbr.rel (%p14) target = $region8
  $region5: #{tpu_custom_call.1} parent=0 // loop_body
    %s18 = ssub.s32 %s13, 1
    %s19 = ssub.s32 %s13, 2
    %s26 = sadd.s32 1, %s21
    %p27 = scmp.ge.s32.totalorder %s26, 3
    %s28 = scalar_select %p27, 0, %s26
    %s29 = sadd.s32 1, %s20
    %s30 = scalar_select %p27, %s29, %s20
    %p31 = scmp.ge.s32.totalorder %s30, 4
    %s32 = scalar_select %p31, 0, %s30
    %s33 = ssub.s32 %s20, %s32
    %s34 = ssub.s32 %s21, %s28
    %s35 = sor.u32 %s33, %s34
    %p36 = scmp.eq.s32.totalorder %s35, 0
    %s38 = sadd.s32 %s37, 1
    %s39 = scalar_select %p36, %s37, %s38
    %p42 = pneg %p36
    %p43 = scmp.eq.s32.totalorder %s13, 11
    %p44 = por %p42, %p43
    %p45 = scmp.ne.s32.totalorder %s37, %s40
    %p46 = scmp.eq.s32.totalorder %s13, 0
    %p47 = por %p45, %p46
    %p48 = scmp.ne.s32.totalorder %s37, %s40
    %p49 = scmp.eq.s32.totalorder %s18, 11
    %p50 = por %p48, %p49
    %p51 = scmp.ne.s32.totalorder %s40, %s41
    %p52 = scmp.eq.s32.totalorder %s18, 0
    %p53 = por %p51, %p52
    %p54 = scmp.ne.s32.totalorder %s40, %s41
    %p55 = scmp.eq.s32.totalorder %s19, 11
    %p56 = por %p54, %p55
    %p58 = scmp.ne.s32.totalorder %s41, %s57
    %p59 = scmp.eq.s32.totalorder %s19, 0
    %p60 = por %p58, %p59
    %s62 = sadd.s32 %s61, 1
    %p65 = scmp.eq.s32.totalorder %s13, 11
    %p66 = scmp.ne.s32.totalorder %s61, %s63
    %p67 = scmp.eq.s32.totalorder %s13, 0
    %p68 = por %p66, %p67
    %p69 = scmp.ne.s32.totalorder %s61, %s63
    %p70 = scmp.eq.s32.totalorder %s18, 11
    %p71 = por %p69, %p70
    %p72 = scmp.ne.s32.totalorder %s63, %s64
    %p73 = scmp.eq.s32.totalorder %s18, 0
    %p74 = por %p72, %p73
    %p75 = scmp.ne.s32.totalorder %s63, %s64
    %p76 = scmp.eq.s32.totalorder %s19, 11
    %p77 = por %p75, %p76
    %p79 = scmp.ne.s32.totalorder %s64, %s78
    %p80 = scmp.eq.s32.totalorder %s19, 0
    %p81 = por %p79, %p80
    %s83 = sadd.s32 %s82, 1
    %p86 = scmp.eq.s32.totalorder %s13, 11
    %p87 = scmp.ne.s32.totalorder %s82, %s84
    %p88 = scmp.eq.s32.totalorder %s13, 0
    %p89 = por %p87, %p88
    %p90 = scmp.ne.s32.totalorder %s82, %s84
    %p91 = scmp.eq.s32.totalorder %s18, 11
    %p92 = por %p90, %p91
    %p93 = scmp.ne.s32.totalorder %s84, %s85
    %p94 = scmp.eq.s32.totalorder %s18, 0
    %p95 = por %p93, %p94
    %p96 = scmp.ne.s32.totalorder %s84, %s85
    %p97 = scmp.eq.s32.totalorder %s19, 11
    %p98 = por %p96, %p97
    %p100 = scmp.ne.s32.totalorder %s85, %s99
    %p101 = scmp.eq.s32.totalorder %s19, 0
    %p102 = por %p100, %p101
    %s104 = sadd.s32 %s103, 1
    %p107 = scmp.eq.s32.totalorder %s13, 11
    %p108 = scmp.ne.s32.totalorder %s103, %s105
    %p109 = scmp.eq.s32.totalorder %s13, 0
    %p110 = por %p108, %p109
    %p111 = scmp.ne.s32.totalorder %s103, %s105
    %p112 = scmp.eq.s32.totalorder %s18, 11
    %p113 = por %p111, %p112
    %p114 = scmp.ne.s32.totalorder %s105, %s106
    %p115 = scmp.eq.s32.totalorder %s18, 0
    %p116 = por %p114, %p115
    %p117 = scmp.ne.s32.totalorder %s105, %s106
    %p118 = scmp.eq.s32.totalorder %s19, 11
    %p119 = por %p117, %p118
    %p121 = scmp.ne.s32.totalorder %s106, %s120
    %p122 = scmp.eq.s32.totalorder %s19, 0
    %p123 = por %p121, %p122
    %s125 = sadd.s32 %s124, 1
    %p128 = scmp.eq.s32.totalorder %s13, 11
    %p129 = scmp.ne.s32.totalorder %s124, %s126
    %p130 = scmp.eq.s32.totalorder %s13, 0
    %p131 = por %p129, %p130
    %p132 = scmp.ne.s32.totalorder %s124, %s126
    %p133 = scmp.eq.s32.totalorder %s18, 11
    %p134 = por %p132, %p133
    %p135 = scmp.ne.s32.totalorder %s126, %s127
    %p136 = scmp.eq.s32.totalorder %s18, 0
    %p137 = por %p135, %p136
    %p138 = scmp.ne.s32.totalorder %s126, %s127
    %p139 = scmp.eq.s32.totalorder %s19, 11
    %p140 = por %p138, %p139
    %p142 = scmp.ne.s32.totalorder %s127, %s141
    %p143 = scmp.eq.s32.totalorder %s19, 0
    %p144 = por %p142, %p143
    %s146 = sadd.s32 %s145, 1
    %p149 = scmp.eq.s32.totalorder %s13, 11
    %p150 = scmp.ne.s32.totalorder %s145, %s147
    %p151 = scmp.eq.s32.totalorder %s13, 0
    %p152 = por %p150, %p151
    %p153 = scmp.ne.s32.totalorder %s145, %s147
    %p154 = scmp.eq.s32.totalorder %s18, 11
    %p155 = por %p153, %p154
    %p156 = scmp.ne.s32.totalorder %s147, %s148
    %p157 = scmp.eq.s32.totalorder %s18, 0
    %p158 = por %p156, %p157
    %p159 = scmp.ne.s32.totalorder %s147, %s148
    %p160 = scmp.eq.s32.totalorder %s19, 11
    %p161 = por %p159, %p160
    %p163 = scmp.ne.s32.totalorder %s148, %s162
    %p164 = scmp.eq.s32.totalorder %s19, 0
    %p165 = por %p163, %p164
    %s167 = sadd.s32 %s166, 1
    %p170 = scmp.eq.s32.totalorder %s13, 11
    %p171 = scmp.ne.s32.totalorder %s166, %s168
    %p172 = scmp.eq.s32.totalorder %s13, 0
    %p173 = por %p171, %p172
    %p174 = scmp.ne.s32.totalorder %s166, %s168
    %p175 = scmp.eq.s32.totalorder %s18, 11
    %p176 = por %p174, %p175
    %p177 = scmp.ne.s32.totalorder %s168, %s169
    %p178 = scmp.eq.s32.totalorder %s18, 0
    %p179 = por %p177, %p178
    %p180 = scmp.ne.s32.totalorder %s168, %s169
    %p181 = scmp.eq.s32.totalorder %s19, 11
    %p182 = por %p180, %p181
    %p184 = scmp.ne.s32.totalorder %s169, %s183
    %p185 = scmp.eq.s32.totalorder %s19, 0
    %p186 = por %p184, %p185
    %s187 = ssub.s32 %s20, %s32
    %p188 = scmp.eq.s32.totalorder %s187, 0
    %s190 = sadd.s32 %s189, 1
    %s191 = scalar_select %p188, %s189, %s190
    %p194 = pneg %p188
    %p195 = scmp.eq.s32.totalorder %s13, 11
    %p196 = por %p194, %p195
    %p197 = scmp.ne.s32.totalorder %s189, %s192
    %p198 = scmp.eq.s32.totalorder %s13, 0
    %p199 = por %p197, %p198
    %p200 = scmp.ne.s32.totalorder %s189, %s192
    %p201 = scmp.eq.s32.totalorder %s18, 11
    %p202 = por %p200, %p201
    %p203 = scmp.ne.s32.totalorder %s192, %s193
    %p204 = scmp.eq.s32.totalorder %s18, 0
    %p205 = por %p203, %p204
    %p206 = scmp.ne.s32.totalorder %s192, %s193
    %p207 = scmp.eq.s32.totalorder %s19, 11
    %p208 = por %p206, %p207
    %p210 = scmp.ne.s32.totalorder %s193, %s209
    %p211 = scmp.eq.s32.totalorder %s19, 0
    %p212 = por %p210, %p211
    %p213 = scmp.le.s32.totalorder 1, %s13
    %p214 = scmp.lt.s32.totalorder %s13, 13
    %p215 = pnand %p213, %p214
    %p216 = pneg %p215
    // Predicated region
    $region9: #{tpu_custom_call.1} parent=5 // pred_check
      _
    $region10: #{tpu_custom_call.1} parent=5 // pred_check_branch
      %218 = sbr.rel (%p215) target = $region12
    $region11: #{tpu_custom_call.1} parent=5 // pred_region
      %s219 = ssub.s32 %s13, 1
      // Predicated region
      $region13: #{tpu_custom_call.1} parent=11 // pred_check
        %p220 = pneg %p74
      $region14: #{tpu_custom_call.1} parent=11 // pred_check_branch
        %222 = sbr.rel (%p220) target = $region16
      $region15: #{tpu_custom_call.1} parent=11 // pred_region
        _
      $region16: #{tpu_custom_call.1} parent=11 // pred_fallthru
        _
      // Predicated region
      $region17: #{tpu_custom_call.1} parent=11 // pred_check
        %p223 = pneg %p95
      $region18: #{tpu_custom_call.1} parent=11 // pred_check_branch
        %225 = sbr.rel (%p223) target = $region20
      $region19: #{tpu_custom_call.1} parent=11 // pred_region
        _
      $region20: #{tpu_custom_call.1} parent=11 // pred_fallthru
        _
      // Predicated region
      $region21: #{tpu_custom_call.1} parent=11 // pred_check
        %p226 = pneg %p116
      $region22: #{tpu_custom_call.1} parent=11 // pred_check_branch
        %228 = sbr.rel (%p226) target = $region24
      $region23: #{tpu_custom_call.1} parent=11 // pred_region
        _
      $region24: #{tpu_custom_call.1} parent=11 // pred_fallthru
        _
      // Predicated region
      $region25: #{tpu_custom_call.1} parent=11 // pred_check
        %p229 = pneg %p137
      $region26: #{tpu_custom_call.1} parent=11 // pred_check_branch
        %231 = sbr.rel (%p229) target = $region28
      $region27: #{tpu_custom_call.1} parent=11 // pred_region
        _
      $region28: #{tpu_custom_call.1} parent=11 // pred_fallthru
        _
      // Predicated region
      $region29: #{tpu_custom_call.1} parent=11 // pred_check
        %p232 = pneg %p158
      $region30: #{tpu_custom_call.1} parent=11 // pred_check_branch
        %234 = sbr.rel (%p232) target = $region32
      $region31: #{tpu_custom_call.1} parent=11 // pred_region
        _
      $region32: #{tpu_custom_call.1} parent=11 // pred_fallthru
        _
      // Predicated region
      $region33: #{tpu_custom_call.1} parent=11 // pred_check
        %p235 = pneg %p179
      $region34: #{tpu_custom_call.1} parent=11 // pred_check_branch
        %237 = sbr.rel (%p235) target = $region36
      $region35: #{tpu_custom_call.1} parent=11 // pred_region
        _
      $region36: #{tpu_custom_call.1} parent=11 // pred_fallthru
        _
    $region12: #{tpu_custom_call.1} parent=5 // pred_fallthru
      _
    %p238 = scmp.lt.s32.totalorder %s13, 12
    // Predicated region
    $region37: #{tpu_custom_call.1} parent=5 // pred_check
      %p239 = pneg %p238
    $region38: #{tpu_custom_call.1} parent=5 // pred_check_branch
      %241 = sbr.rel (%p239) target = $region40
    $region39: #{tpu_custom_call.1} parent=5 // pred_region
      // Predicated region
      $region41: #{tpu_custom_call.1} parent=39 // pred_check
        %p242 = pneg %p47
      $region42: #{tpu_custom_call.1} parent=39 // pred_check_branch
        %244 = sbr.rel (%p242) target = $region44
      $region43: #{tpu_custom_call.1} parent=39 // pred_region
        %p245 = scmp.lt.s32.totalorder %s20, 3
        %s246 = scalar_select %p245, %s20, 3
        %p247 = scmp.lt.s32.totalorder %s21, 2
        %s248 = scalar_select %p247, %s21, 2
        %s249 = smul.addr %s248, 16
        %s250 = smul.addr %s246, 48
        %s251 = sadd.s32 %s249, %s250
        %s252 = smul.addr %s251, 4
        %s253 = scalar_lea.vmem %s0, %s252
      $region44: #{tpu_custom_call.1} parent=39 // pred_fallthru
        _
    $region40: #{tpu_custom_call.1} parent=5 // pred_fallthru
      _
    %p254 = scmp.le.s32.totalorder 1, %s13
    %p255 = scmp.lt.s32.totalorder %s13, 13
    %p256 = pnand %p254, %p255
    %p257 = pneg %p256
    // Predicated region
    $region45: #{tpu_custom_call.1} parent=5 // pred_check
      _
    $region46: #{tpu_custom_call.1} parent=5 // pred_check_branch
      %259 = sbr.rel (%p256) target = $region48
    $region47: #{tpu_custom_call.1} parent=5 // pred_region
      %s260 = ssub.s32 %s13, 1
      %p261 = scmp.lt.s32.totalorder %s22, 3
      %s262 = scalar_select %p261, %s22, 3
      %p263 = scmp.lt.s32.totalorder %s23, 2
      %s264 = scalar_select %p263, %s23, 2
      %s265 = smul.addr %s264, 16
      %s266 = smul.addr %s262, 48
      %s267 = sadd.s32 %s265, %s266
      %s268 = smul.addr %s267, 4
      %s269 = scalar_lea.vmem %s0, %s268
      %p270 = pneg %p53
      %p271 = pneg %p50
      %p272 = pneg %p74
      %p273 = pneg %p71
      %p274 = pneg %p95
      %p275 = pneg %p92
      %p276 = pneg %p116
      %p277 = pneg %p113
      %p278 = pneg %p137
      %p279 = pneg %p134
      %p280 = pneg %p158
      %p281 = pneg %p155
      %p282 = pneg %p179
      %p283 = pneg %p176
      %p284 = pneg %p205
      %p285 = pneg %p202
      %p286 = scmp.lt.s32.totalorder %s22, 3
      %s287 = scalar_select %p286, %s22, 3
      %s288 = smul.addr %s287, 8
      %s289 = smul.addr %s288, 8
      %s290 = scalar_lea.vmem %s7, %s289
      %p291 = scmp.lt.s32.totalorder %s22, 3
      %s292 = scalar_select %p291, %s22, 3
      %p293 = scmp.lt.s32.totalorder %s23, 2
      %s294 = scalar_select %p293, %s23, 2
      %s295 = smul.addr %s294, 16
      %s296 = smul.addr %s292, 48
      %s297 = sadd.s32 %s295, %s296
      %s298 = smul.addr %s297, 4
      %s299 = scalar_lea.vmem %s0, %s298
      %p300 = scmp.lt.s32.totalorder %s22, 3
      %s301 = scalar_select %p300, %s22, 3
      %s302 = smul.addr %s301, 8
      %s303 = smul.addr %s302, 8
      %s304 = scalar_lea.vmem %s7, %s303
      %v306 = vld [vmem:[%s299] sm:$0xf]
      %v307 = vld [vmem:[%s299 + $0x4] sm:$0xf]
      %v308 = vld [vmem:[%s299 + $0x8] sm:$0xf]
      %v309 = vld [vmem:[%s299 + $0xc] sm:$0xf]
      %v310 = vld [vmem:[%s299 + $0x10] sm:$0xf]
      %v311 = vld [vmem:[%s299 + $0x14] sm:$0xf]
      %v312 = vld [vmem:[%s299 + $0x18] sm:$0xf]
      %v313 = vld [vmem:[%s299 + $0x1c] sm:$0xf]
      %v314 = vld [vmem:[%s299 + $0x20] sm:$0xf]
      %v315 = vld [vmem:[%s299 + $0x24] sm:$0xf]
      %v316 = vld [vmem:[%s299 + $0x28] sm:$0xf]
      %v317 = vld [vmem:[%s299 + $0x2c] sm:$0xf]
      %v318 = vld [vmem:[%s299 + $0x30] sm:$0xf]
      %v319 = vld [vmem:[%s299 + $0x34] sm:$0xf]
      %v320 = vld [vmem:[%s299 + $0x38] sm:$0xf]
      %v321 = vld [vmem:[%s299 + $0x3c] sm:$0xf]
      %v322 = vld [vmem:[%s1] sm:$0xf]
      %v339 = vunpack.c.l.b16 %v306
      %v340 = vunpack.c.l.b16 %v307
      %v341 = vunpack.c.l.b16 %v308
      %v342 = vunpack.c.l.b16 %v309
      %v343 = vunpack.c.l.b16 %v310
      %v344 = vunpack.c.l.b16 %v311
      %v345 = vunpack.c.l.b16 %v312
      %v346 = vunpack.c.l.b16 %v313
      %v347 = vunpack.c.l.b16 %v314
      %v348 = vunpack.c.l.b16 %v315
      %v349 = vunpack.c.l.b16 %v316
      %v350 = vunpack.c.l.b16 %v317
      %v351 = vunpack.c.l.b16 %v318
      %v352 = vunpack.c.l.b16 %v319
      %v353 = vunpack.c.l.b16 %v320
      %v354 = vunpack.c.l.b16 %v321
      %v355 = vpack.c.b16 %v340, %v339
      %v356 = vpack.c.b16 %v342, %v341
      %v357 = vpack.c.b16 %v344, %v343
      %v358 = vpack.c.b16 %v346, %v345
      %v359 = vpack.c.b16 %v348, %v347
      %v360 = vpack.c.b16 %v350, %v349
      %v361 = vpack.c.b16 %v352, %v351
      %v362 = vpack.c.b16 %v354, %v353
      %vm363 = vcmask 64512
      %v365 = vsel %vm363, %v355, 0
      %v368 = vsel %vm363, %v356, 0
      %v371 = vsel %vm363, %v357, 0
      %v374 = vsel %vm363, %v358, 0
      %v377 = vsel %vm363, %v359, 0
      %v380 = vsel %vm363, %v360, 0
      %v383 = vsel %vm363, %v361, 0
      %v386 = vsel %vm363, %v362, 0
      %vm388 = vcmask 1043456
      %v390 = vsel %vm388, %v322, 0
      %392 = vmatprep.subr.bf16.mxu0 0
      %393 = vmatpush1.bf16.msra.mxu0 %v390
      %394 = vmatprep.subr.bf16.mxu0 0
      %395 = vmatpush1.bf16.msra.mxu0 0
      %396 = vmatprep.subr.bf16.mxu0 0
      %397 = vmatpush1.bf16.msra.mxu0 0
      %398 = vmatprep.subr.bf16.mxu0 0
      %399 = vmatpush1.bf16.msra.mxu0 0
      %400 = vmatprep.subr.bf16.mxu0 0
      %401 = vmatpush1.bf16.msra.mxu0 0
      %402 = vmatprep.subr.bf16.mxu0 0
      %403 = vmatpush1.bf16.msra.mxu0 0
      %404 = vmatprep.subr.bf16.mxu0 0
      %405 = vmatpush1.bf16.msra.mxu0 0
      %406 = vmatprep.subr.bf16.mxu0 0
      %407 = vmatpush1.bf16.msra.mxu0 0
      %408 = vmatprep.subr.bf16.mxu0 0
      %409 = vmatpush1.bf16.msra.mxu0 0
      %410 = vmatprep.subr.bf16.mxu0 0
      %411 = vmatpush1.bf16.msra.mxu0 0
      %412 = vmatprep.subr.bf16.mxu0 0
      %413 = vmatpush1.bf16.msra.mxu0 0
      %414 = vmatprep.subr.bf16.mxu0 0
      %415 = vmatpush1.bf16.msra.mxu0 0
      %416 = vmatprep.subr.bf16.mxu0 0
      %417 = vmatpush1.bf16.msra.mxu0 0
      %418 = vmatprep.subr.bf16.mxu0 0
      %419 = vmatpush1.bf16.msra.mxu0 0
      %420 = vmatprep.subr.bf16.mxu0 0
      %421 = vmatpush1.bf16.msra.mxu0 0
      %422 = vmatprep.subr.bf16.mxu0 0
      %423 = vmatpush1.bf16.msra.mxu0 0
      %424 = vmatprep.mubr.bf16.mxu0 0
      %425 = vmatmul.mubr.bf16.gmra.mrb[0].mxu0 %v365
      %v426 = vpop.f32.mrb[0].mxu0
      %v427 = vadd.f32 0.0, %v426
      %v428 = vpop.f32.mrb[0].mxu0
      %v429 = vpop.f32.mrb[0].mxu0
      %v430 = vadd.f32 0.0, %v429
      %v431 = vpop.f32.mrb[0].mxu0
      %432 = vmatprep.mubr.bf16.mxu0 0
      %433 = vmatmul.mubr.bf16.gmra.mrb[0].mxu0 %v368
      %v434 = vpop.f32.mrb[0].mxu0
      %v435 = vadd.f32 0.0, %v434
      %v436 = vpop.f32.mrb[0].mxu0
      %v437 = vpop.f32.mrb[0].mxu0
      %v438 = vadd.f32 0.0, %v437
      %v439 = vpop.f32.mrb[0].mxu0
      %440 = vmatprep.mubr.bf16.mxu0 0
      %441 = vmatmul.mubr.bf16.gmra.mrb[0].mxu0 %v371
      %v442 = vpop.f32.mrb[0].mxu0
      %v443 = vadd.f32 0.0, %v442
      %v444 = vpop.f32.mrb[0].mxu0
      %v445 = vpop.f32.mrb[0].mxu0
      %v446 = vadd.f32 0.0, %v445
      %v447 = vpop.f32.mrb[0].mxu0
      %448 = vmatprep.mubr.bf16.mxu0 0
      %449 = vmatmul.mubr.bf16.gmra.mrb[0].mxu0 %v374
      %v450 = vpop.f32.mrb[0].mxu0
      %v451 = vadd.f32 0.0, %v450
      %v452 = vpop.f32.mrb[0].mxu0
      %v453 = vpop.f32.mrb[0].mxu0
      %v454 = vadd.f32 0.0, %v453
      %v455 = vpop.f32.mrb[0].mxu0
      %456 = vmatprep.mubr.bf16.mxu0 0
      %457 = vmatmul.mubr.bf16.gmra.mrb[0].mxu0 %v377
      %v458 = vpop.f32.mrb[0].mxu0
      %v459 = vadd.f32 0.0, %v458
      %v460 = vpop.f32.mrb[0].mxu0
      %v461 = vpop.f32.mrb[0].mxu0
      %v462 = vadd.f32 0.0, %v461
      %v463 = vpop.f32.mrb[0].mxu0
      %464 = vmatprep.mubr.bf16.mxu0 0
      %465 = vmatmul.mubr.bf16.gmra.mrb[0].mxu0 %v380
      %v466 = vpop.f32.mrb[0].mxu0
      %v467 = vadd.f32 0.0, %v466
      %v468 = vpop.f32.mrb[0].mxu0
      %v469 = vpop.f32.mrb[0].mxu0
      %v470 = vadd.f32 0.0, %v469
      %v471 = vpop.f32.mrb[0].mxu0
      %472 = vmatprep.mubr.bf16.mxu0 0
      %473 = vmatmul.mubr.bf16.gmra.mrb[0].mxu0 %v383
      %v474 = vpop.f32.mrb[0].mxu0
      %v475 = vadd.f32 0.0, %v474
      %v476 = vpop.f32.mrb[0].mxu0
      %v477 = vpop.f32.mrb[0].mxu0
      %v478 = vadd.f32 0.0, %v477
      %v479 = vpop.f32.mrb[0].mxu0
      %480 = vmatprep.mubr.bf16.mxu0 0
      %481 = vmatmul.mubr.bf16.gmra.mrb[0].mxu0 %v386
      %v482 = vpop.f32.mrb[0].mxu0
      %v483 = vadd.f32 0.0, %v482
      %v484 = vpop.f32.mrb[0].mxu0
      %v485 = vpop.f32.mrb[0].mxu0
      %v486 = vadd.f32 0.0, %v485
      %v487 = vpop.f32.mrb[0].mxu0
      %488 = vdwg.mxu0
      %v489 = vld [vmem:[%s2] sm:$0x3]
      %vm490 = vcmask 261120
      %v491 = vsel %vm490, %v427, 0.0
      %v492 = vsel %vm490, %v430, 0.0
      %v493 = vadd.f32 %v491, %v492
      %v494 = vsel %vm490, %v435, 0.0
      %v495 = vadd.f32 %v493, %v494
      %v496 = vsel %vm490, %v438, 0.0
      %v497 = vadd.f32 %v495, %v496
      %v498 = vsel %vm490, %v443, 0.0
      %v499 = vadd.f32 %v497, %v498
      %v500 = vsel %vm490, %v446, 0.0
      %v501 = vadd.f32 %v499, %v500
      %v502 = vsel %vm490, %v451, 0.0
      %v503 = vadd.f32 %v501, %v502
      %v504 = vsel %vm490, %v454, 0.0
      %v505 = vadd.f32 %v503, %v504
      %v506 = vsel %vm490, %v459, 0.0
      %v507 = vadd.f32 %v505, %v506
      %v508 = vsel %vm490, %v462, 0.0
      %v509 = vadd.f32 %v507, %v508
      %v510 = vsel %vm490, %v467, 0.0
      %v511 = vadd.f32 %v509, %v510
      %v512 = vsel %vm490, %v470, 0.0
      %v513 = vadd.f32 %v511, %v512
      %v514 = vsel %vm490, %v475, 0.0
      %v515 = vadd.f32 %v513, %v514
      %v516 = vsel %vm490, %v478, 0.0
      %v517 = vadd.f32 %v515, %v516
      %v518 = vsel %vm490, %v483, 0.0
      %v519 = vadd.f32 %v517, %v518
      %v520 = vsel %vm490, %v486, 0.0
      %v521 = vadd.f32 %v519, %v520
      %v522 = vrot.slane %v521, 4
      %v523 = vadd.f32 %v521, %v522
      %v524 = vrot.slane %v523, 2
      %v525 = vadd.f32 %v523, %v524
      %v526 = vrot.slane %v525, 1
      %v527 = vadd.f32 %v525, %v526
      %v528 = vmul.f32 %v427, %v427
      %v529 = vmul.f32 %v430, %v430
      %v530 = vmul.f32 %v435, %v435
      %v531 = vmul.f32 %v438, %v438
      %v532 = vmul.f32 %v443, %v443
      %v533 = vmul.f32 %v446, %v446
      %v534 = vmul.f32 %v451, %v451
      %v535 = vmul.f32 %v454, %v454
      %v536 = vmul.f32 %v459, %v459
      %v537 = vmul.f32 %v462, %v462
      %v538 = vmul.f32 %v467, %v467
      %v539 = vmul.f32 %v470, %v470
      %v540 = vmul.f32 %v475, %v475
      %v541 = vmul.f32 %v478, %v478
      %v542 = vmul.f32 %v483, %v483
      %v543 = vmul.f32 %v486, %v486
      %v544 = vsel %vm490, %v528, 0.0
      %v545 = vsel %vm490, %v529, 0.0
      %v546 = vadd.f32 %v544, %v545
      %v547 = vsel %vm490, %v530, 0.0
      %v548 = vadd.f32 %v546, %v547
      %v549 = vsel %vm490, %v531, 0.0
      %v550 = vadd.f32 %v548, %v549
      %v551 = vsel %vm490, %v532, 0.0
      %v552 = vadd.f32 %v550, %v551
      %v553 = vsel %vm490, %v533, 0.0
      %v554 = vadd.f32 %v552, %v553
      %v555 = vsel %vm490, %v534, 0.0
      %v556 = vadd.f32 %v554, %v555
      %v557 = vsel %vm490, %v535, 0.0
      %v558 = vadd.f32 %v556, %v557
      %v559 = vsel %vm490, %v536, 0.0
      %v560 = vadd.f32 %v558, %v559
      %v561 = vsel %vm490, %v537, 0.0
      %v562 = vadd.f32 %v560, %v561
      %v563 = vsel %vm490, %v538, 0.0
      %v564 = vadd.f32 %v562, %v563
      %v565 = vsel %vm490, %v539, 0.0
      %v566 = vadd.f32 %v564, %v565
      %v567 = vsel %vm490, %v540, 0.0
      %v568 = vadd.f32 %v566, %v567
      %v569 = vsel %vm490, %v541, 0.0
      %v570 = vadd.f32 %v568, %v569
      %v571 = vsel %vm490, %v542, 0.0
      %v572 = vadd.f32 %v570, %v571
      %v573 = vsel %vm490, %v543, 0.0
      %v574 = vadd.f32 %v572, %v573
      %v575 = vrot.slane %v574, 4
      %v576 = vadd.f32 %v574, %v575
      %v577 = vrot.slane %v576, 2
      %v578 = vadd.f32 %v576, %v577
      %v579 = vrot.slane %v578, 1
      %v580 = vadd.f32 %v578, %v579
      %v581 = vmul.f32 %v527, 0.0078125
      %v582 = vmul.f32 %v580, 0.0078125
      %v583 = vmul.f32 %v581, %v581
      %v584 = vsub.f32 %v582, %v583
      %v585 = vmax.f32 %v584, 0.0
      %v586 = vadd.f32 %v585, 1e-05
      %v587 = vrsqrt.pop %v586
      %v588 = vmul.f32 %v489, %v587
      %v589 = vmul.f32 %v581, %v588
      %v591 = vrot.slane %v589, 7
      %v593 = vsub.f32 %v489, %v591
      %v594 = vlaneseq
      %v595 = vshrl.u32 %v594, 7
      %v596 = vsub.s32 0, %v595
      %v597 = vrot.slane %v588, %v596
      %v598 = vmul.f32 %v427, %v597
      %v599 = vmul.f32 %v430, %v597
      %v600 = vmul.f32 %v435, %v597
      %v601 = vmul.f32 %v438, %v597
      %v602 = vmul.f32 %v443, %v597
      %v603 = vmul.f32 %v446, %v597
      %v604 = vmul.f32 %v451, %v597
      %v605 = vmul.f32 %v454, %v597
      %v606 = vmul.f32 %v459, %v597
      %v607 = vmul.f32 %v462, %v597
      %v608 = vmul.f32 %v467, %v597
      %v609 = vmul.f32 %v470, %v597
      %v610 = vmul.f32 %v475, %v597
      %v611 = vmul.f32 %v478, %v597
      %v612 = vmul.f32 %v483, %v597
      %v613 = vmul.f32 %v486, %v597
      %v614 = vlaneseq
      %v615 = vshrl.u32 %v614, 7
      %v616 = vsub.s32 1, %v615
      %v617 = vrot.slane %v593, %v616
      %v618 = vadd.f32 %v598, %v617
      %v619 = vadd.f32 %v599, %v617
      %v620 = vadd.f32 %v600, %v617
      %v621 = vadd.f32 %v601, %v617
      %v622 = vadd.f32 %v602, %v617
      %v623 = vadd.f32 %v603, %v617
      %v624 = vadd.f32 %v604, %v617
      %v625 = vadd.f32 %v605, %v617
      %v626 = vadd.f32 %v606, %v617
      %v627 = vadd.f32 %v607, %v617
      %v628 = vadd.f32 %v608, %v617
      %v629 = vadd.f32 %v609, %v617
      %v630 = vadd.f32 %v610, %v617
      %v631 = vadd.f32 %v611, %v617
      %v632 = vadd.f32 %v612, %v617
      %v633 = vadd.f32 %v613, %v617
      %v634 = vmax.f32 %v618, 0.0
      %v635 = vmax.f32 %v619, 0.0
      %v636 = vmax.f32 %v620, 0.0
      %v637 = vmax.f32 %v621, 0.0
      %v638 = vmax.f32 %v622, 0.0
      %v639 = vmax.f32 %v623, 0.0
      %v640 = vmax.f32 %v624, 0.0
      %v641 = vmax.f32 %v625, 0.0
      %v642 = vmax.f32 %v626, 0.0
      %v643 = vmax.f32 %v627, 0.0
      %v644 = vmax.f32 %v628, 0.0
      %v645 = vmax.f32 %v629, 0.0
      %v646 = vmax.f32 %v630, 0.0
      %v647 = vmax.f32 %v631, 0.0
      %v648 = vmax.f32 %v632, 0.0
      %v649 = vmax.f32 %v633, 0.0
      %v650 = vld [vmem:[%s3] sm:$0xf]
      %v651 = vld [vmem:[%s3 + $0x4] sm:$0xf]
      %v652 = vld [vmem:[%s3 + $0x8] sm:$0xf]
      %v653 = vld [vmem:[%s3 + $0xc] sm:$0xf]
      %v654 = vpack.c.bf16 %v635, %v634
      %v655 = vpack.c.bf16 %v637, %v636
      %v656 = vpack.c.bf16 %v639, %v638
      %v657 = vpack.c.bf16 %v641, %v640
      %v658 = vpack.c.bf16 %v643, %v642
      %v659 = vpack.c.bf16 %v645, %v644
      %v660 = vpack.c.bf16 %v647, %v646
      %v661 = vpack.c.bf16 %v649, %v648
      %v666 = vunpack.c.l.b16 %v650
      %v667 = vunpack.c.l.b16 %v651
      %v668 = vunpack.c.l.b16 %v652
      %v669 = vunpack.c.l.b16 %v653
      %v670 = vpack.c.b16 %v667, %v666
      %v671 = vpack.c.b16 %v669, %v668
      %v675 = vsel %vm490, %v654, 0
      %v678 = vsel %vm490, %v655, 0
      %v681 = vsel %vm490, %v656, 0
      %v684 = vsel %vm490, %v657, 0
      %v687 = vsel %vm490, %v658, 0
      %v690 = vsel %vm490, %v659, 0
      %v693 = vsel %vm490, %v660, 0
      %v696 = vsel %vm490, %v661, 0
      %698 = vmatprep.subr.bf16.mxu0 0
      %699 = vmatpush1.bf16.msra.mxu0 %v670
      %700 = vmatprep.subr.bf16.mxu0 0
      %701 = vmatpush1.bf16.msra.mxu0 %v671
      %702 = vmatprep.subr.bf16.mxu0 0
      %703 = vmatpush1.bf16.msra.mxu0 0
      %704 = vmatprep.subr.bf16.mxu0 0
      %705 = vmatpush1.bf16.msra.mxu0 0
      %706 = vmatprep.subr.bf16.mxu0 0
      %707 = vmatpush1.bf16.msra.mxu0 0
      %708 = vmatprep.subr.bf16.mxu0 0
      %709 = vmatpush1.bf16.msra.mxu0 0
      %710 = vmatprep.subr.bf16.mxu0 0
      %711 = vmatpush1.bf16.msra.mxu0 0
      %712 = vmatprep.subr.bf16.mxu0 0
      %713 = vmatpush1.bf16.msra.mxu0 0
      %714 = vmatprep.subr.bf16.mxu0 0
      %715 = vmatpush1.bf16.msra.mxu0 0
      %716 = vmatprep.subr.bf16.mxu0 0
      %717 = vmatpush1.bf16.msra.mxu0 0
      %718 = vmatprep.subr.bf16.mxu0 0
      %719 = vmatpush1.bf16.msra.mxu0 0
      %720 = vmatprep.subr.bf16.mxu0 0
      %721 = vmatpush1.bf16.msra.mxu0 0
      %722 = vmatprep.subr.bf16.mxu0 0
      %723 = vmatpush1.bf16.msra.mxu0 0
      %724 = vmatprep.subr.bf16.mxu0 0
      %725 = vmatpush1.bf16.msra.mxu0 0
      %726 = vmatprep.subr.bf16.mxu0 0
      %727 = vmatpush1.bf16.msra.mxu0 0
      %728 = vmatprep.subr.bf16.mxu0 0
      %729 = vmatpush1.bf16.msra.mxu0 0
      %730 = vmatprep.mubr.bf16.mxu0 0
      %731 = vmatmul.mubr.bf16.gmra.mrb[0].mxu0 %v675
      %v732 = vpop.f32.mrb[0].mxu0
      %v733 = vadd.f32 0.0, %v732
      %v734 = vpop.f32.mrb[0].mxu0
      %v735 = vpop.f32.mrb[0].mxu0
      %v736 = vadd.f32 0.0, %v735
      %v737 = vpop.f32.mrb[0].mxu0
      %738 = vmatprep.mubr.bf16.mxu0 0
      %739 = vmatmul.mubr.bf16.gmra.mrb[0].mxu0 %v678
      %v740 = vpop.f32.mrb[0].mxu0
      %v741 = vadd.f32 0.0, %v740
      %v742 = vpop.f32.mrb[0].mxu0
      %v743 = vpop.f32.mrb[0].mxu0
      %v744 = vadd.f32 0.0, %v743
      %v745 = vpop.f32.mrb[0].mxu0
      %746 = vmatprep.mubr.bf16.mxu0 0
      %747 = vmatmul.mubr.bf16.gmra.mrb[0].mxu0 %v681
      %v748 = vpop.f32.mrb[0].mxu0
      %v749 = vadd.f32 0.0, %v748
      %v750 = vpop.f32.mrb[0].mxu0
      %v751 = vpop.f32.mrb[0].mxu0
      %v752 = vadd.f32 0.0, %v751
      %v753 = vpop.f32.mrb[0].mxu0
      %754 = vmatprep.mubr.bf16.mxu0 0
      %755 = vmatmul.mubr.bf16.gmra.mrb[0].mxu0 %v684
      %v756 = vpop.f32.mrb[0].mxu0
      %v757 = vadd.f32 0.0, %v756
      %v758 = vpop.f32.mrb[0].mxu0
      %v759 = vpop.f32.mrb[0].mxu0
      %v760 = vadd.f32 0.0, %v759
      %v761 = vpop.f32.mrb[0].mxu0
      %762 = vmatprep.mubr.bf16.mxu0 0
      %763 = vmatmul.mubr.bf16.gmra.mrb[0].mxu0 %v687
      %v764 = vpop.f32.mrb[0].mxu0
      %v765 = vadd.f32 0.0, %v764
      %v766 = vpop.f32.mrb[0].mxu0
      %v767 = vpop.f32.mrb[0].mxu0
      %v768 = vadd.f32 0.0, %v767
      %v769 = vpop.f32.mrb[0].mxu0
      %770 = vmatprep.mubr.bf16.mxu0 0
      %771 = vmatmul.mubr.bf16.gmra.mrb[0].mxu0 %v690
      %v772 = vpop.f32.mrb[0].mxu0
      %v773 = vadd.f32 0.0, %v772
      %v774 = vpop.f32.mrb[0].mxu0
      %v775 = vpop.f32.mrb[0].mxu0
      %v776 = vadd.f32 0.0, %v775
      %v777 = vpop.f32.mrb[0].mxu0
      %778 = vmatprep.mubr.bf16.mxu0 0
      %779 = vmatmul.mubr.bf16.gmra.mrb[0].mxu0 %v693
      %v780 = vpop.f32.mrb[0].mxu0
      %v781 = vadd.f32 0.0, %v780
      %v782 = vpop.f32.mrb[0].mxu0
      %v783 = vpop.f32.mrb[0].mxu0
      %v784 = vadd.f32 0.0, %v783
      %v785 = vpop.f32.mrb[0].mxu0
      %786 = vmatprep.mubr.bf16.mxu0 0
      %787 = vmatmul.mubr.bf16.gmra.mrb[0].mxu0 %v696
      %v788 = vpop.f32.mrb[0].mxu0
      %v789 = vadd.f32 0.0, %v788
      %v790 = vpop.f32.mrb[0].mxu0
      %v791 = vpop.f32.mrb[0].mxu0
      %v792 = vadd.f32 0.0, %v791
      %v793 = vpop.f32.mrb[0].mxu0
      %794 = vdwg.mxu0
      %v795 = vld [vmem:[%s4] sm:$0x3]
      %vm796 = vcmask 523264
      %v797 = vsel %vm796, %v733, 0.0
      %v798 = vsel %vm796, %v736, 0.0
      %v799 = vadd.f32 %v797, %v798
      %v800 = vsel %vm796, %v741, 0.0
      %v801 = vadd.f32 %v799, %v800
      %v802 = vsel %vm796, %v744, 0.0
      %v803 = vadd.f32 %v801, %v802
      %v804 = vsel %vm796, %v749, 0.0
      %v805 = vadd.f32 %v803, %v804
      %v806 = vsel %vm796, %v752, 0.0
      %v807 = vadd.f32 %v805, %v806
      %v808 = vsel %vm796, %v757, 0.0
      %v809 = vadd.f32 %v807, %v808
      %v810 = vsel %vm796, %v760, 0.0
      %v811 = vadd.f32 %v809, %v810
      %v812 = vsel %vm796, %v765, 0.0
      %v813 = vadd.f32 %v811, %v812
      %v814 = vsel %vm796, %v768, 0.0
      %v815 = vadd.f32 %v813, %v814
      %v816 = vsel %vm796, %v773, 0.0
      %v817 = vadd.f32 %v815, %v816
      %v818 = vsel %vm796, %v776, 0.0
      %v819 = vadd.f32 %v817, %v818
      %v820 = vsel %vm796, %v781, 0.0
      %v821 = vadd.f32 %v819, %v820
      %v822 = vsel %vm796, %v784, 0.0
      %v823 = vadd.f32 %v821, %v822
      %v824 = vsel %vm796, %v789, 0.0
      %v825 = vadd.f32 %v823, %v824
      %v826 = vsel %vm796, %v792, 0.0
      %v827 = vadd.f32 %v825, %v826
      %v828 = vrot.slane %v827, 4
      %v829 = vadd.f32 %v827, %v828
      %v830 = vrot.slane %v829, 2
      %v831 = vadd.f32 %v829, %v830
      %v832 = vrot.slane %v831, 1
      %v833 = vadd.f32 %v831, %v832
      %v834 = vmul.f32 %v733, %v733
      %v835 = vmul.f32 %v736, %v736
      %v836 = vmul.f32 %v741, %v741
      %v837 = vmul.f32 %v744, %v744
      %v838 = vmul.f32 %v749, %v749
      %v839 = vmul.f32 %v752, %v752
      %v840 = vmul.f32 %v757, %v757
      %v841 = vmul.f32 %v760, %v760
      %v842 = vmul.f32 %v765, %v765
      %v843 = vmul.f32 %v768, %v768
      %v844 = vmul.f32 %v773, %v773
      %v845 = vmul.f32 %v776, %v776
      %v846 = vmul.f32 %v781, %v781
      %v847 = vmul.f32 %v784, %v784
      %v848 = vmul.f32 %v789, %v789
      %v849 = vmul.f32 %v792, %v792
      %v850 = vsel %vm796, %v834, 0.0
      %v851 = vsel %vm796, %v835, 0.0
      %v852 = vadd.f32 %v850, %v851
      %v853 = vsel %vm796, %v836, 0.0
      %v854 = vadd.f32 %v852, %v853
      %v855 = vsel %vm796, %v837, 0.0
      %v856 = vadd.f32 %v854, %v855
      %v857 = vsel %vm796, %v838, 0.0
      %v858 = vadd.f32 %v856, %v857
      %v859 = vsel %vm796, %v839, 0.0
      %v860 = vadd.f32 %v858, %v859
      %v861 = vsel %vm796, %v840, 0.0
      %v862 = vadd.f32 %v860, %v861
      %v863 = vsel %vm796, %v841, 0.0
      %v864 = vadd.f32 %v862, %v863
      %v865 = vsel %vm796, %v842, 0.0
      %v866 = vadd.f32 %v864, %v865
      %v867 = vsel %vm796, %v843, 0.0
      %v868 = vadd.f32 %v866, %v867
      %v869 = vsel %vm796, %v844, 0.0
      %v870 = vadd.f32 %v868, %v869
      %v871 = vsel %vm796, %v845, 0.0
      %v872 = vadd.f32 %v870, %v871
      %v873 = vsel %vm796, %v846, 0.0
      %v874 = vadd.f32 %v872, %v873
      %v875 = vsel %vm796, %v847, 0.0
      %v876 = vadd.f32 %v874, %v875
      %v877 = vsel %vm796, %v848, 0.0
      %v878 = vadd.f32 %v876, %v877
      %v879 = vsel %vm796, %v849, 0.0
      %v880 = vadd.f32 %v878, %v879
      %v881 = vrot.slane %v880, 4
      %v882 = vadd.f32 %v880, %v881
      %v883 = vrot.slane %v882, 2
      %v884 = vadd.f32 %v882, %v883
      %v885 = vrot.slane %v884, 1
      %v886 = vadd.f32 %v884, %v885
      %v887 = vmul.f32 %v833, 0.0078125
      %v888 = vmul.f32 %v886, 0.0078125
      %v889 = vmul.f32 %v887, %v887
      %v890 = vsub.f32 %v888, %v889
      %v891 = vmax.f32 %v890, 0.0
      %v892 = vadd.f32 %v891, 1e-05
      %v893 = vrsqrt.pop %v892
      %v894 = vmul.f32 %v795, %v893
      %v895 = vmul.f32 %v887, %v894
      %v897 = vrot.slane %v895, 7
      %v899 = vsub.f32 %v795, %v897
      %v900 = vlaneseq
      %v901 = vshrl.u32 %v900, 7
      %v902 = vsub.s32 0, %v901
      %v903 = vrot.slane %v894, %v902
      %v904 = vmul.f32 %v733, %v903
      %v905 = vmul.f32 %v736, %v903
      %v906 = vmul.f32 %v741, %v903
      %v907 = vmul.f32 %v744, %v903
      %v908 = vmul.f32 %v749, %v903
      %v909 = vmul.f32 %v752, %v903
      %v910 = vmul.f32 %v757, %v903
      %v911 = vmul.f32 %v760, %v903
      %v912 = vmul.f32 %v765, %v903
      %v913 = vmul.f32 %v768, %v903
      %v914 = vmul.f32 %v773, %v903
      %v915 = vmul.f32 %v776, %v903
      %v916 = vmul.f32 %v781, %v903
      %v917 = vmul.f32 %v784, %v903
      %v918 = vmul.f32 %v789, %v903
      %v919 = vmul.f32 %v792, %v903
      %v920 = vlaneseq
      %v921 = vshrl.u32 %v920, 7
      %v922 = vsub.s32 1, %v921
      %v923 = vrot.slane %v899, %v922
      %v924 = vadd.f32 %v904, %v923
      %v925 = vadd.f32 %v905, %v923
      %v926 = vadd.f32 %v906, %v923
      %v927 = vadd.f32 %v907, %v923
      %v928 = vadd.f32 %v908, %v923
      %v929 = vadd.f32 %v909, %v923
      %v930 = vadd.f32 %v910, %v923
      %v931 = vadd.f32 %v911, %v923
      %v932 = vadd.f32 %v912, %v923
      %v933 = vadd.f32 %v913, %v923
      %v934 = vadd.f32 %v914, %v923
      %v935 = vadd.f32 %v915, %v923
      %v936 = vadd.f32 %v916, %v923
      %v937 = vadd.f32 %v917, %v923
      %v938 = vadd.f32 %v918, %v923
      %v939 = vadd.f32 %v919, %v923
      %v940 = vmax.f32 %v924, 0.0
      %v941 = vmax.f32 %v925, 0.0
      %v942 = vmax.f32 %v926, 0.0
      %v943 = vmax.f32 %v927, 0.0
      %v944 = vmax.f32 %v928, 0.0
      %v945 = vmax.f32 %v929, 0.0
      %v946 = vmax.f32 %v930, 0.0
      %v947 = vmax.f32 %v931, 0.0
      %v948 = vmax.f32 %v932, 0.0
      %v949 = vmax.f32 %v933, 0.0
      %v950 = vmax.f32 %v934, 0.0
      %v951 = vmax.f32 %v935, 0.0
      %v952 = vmax.f32 %v936, 0.0
      %v953 = vmax.f32 %v937, 0.0
      %v954 = vmax.f32 %v938, 0.0
      %v955 = vmax.f32 %v939, 0.0
      %v956 = vsel %vm796, %v940, -inf
      %v957 = vrot.slane %v956, 4
      %v958 = vmax.f32 %v956, %v957
      %v959 = vrot.slane %v958, 2
      %v960 = vmax.f32 %v958, %v959
      %v961 = vrot.slane %v960, 1
      %v962 = vmax.f32 %v960, %v961
      %v963 = vsel %vm796, %v941, -inf
      %v964 = vrot.slane %v963, 4
      %v965 = vmax.f32 %v963, %v964
      %v966 = vrot.slane %v965, 2
      %v967 = vmax.f32 %v965, %v966
      %v968 = vrot.slane %v967, 1
      %v969 = vmax.f32 %v967, %v968
      %v970 = vsel %vm796, %v942, -inf
      %v971 = vrot.slane %v970, 4
      %v972 = vmax.f32 %v970, %v971
      %v973 = vrot.slane %v972, 2
      %v974 = vmax.f32 %v972, %v973
      %v975 = vrot.slane %v974, 1
      %v976 = vmax.f32 %v974, %v975
      %v977 = vsel %vm796, %v943, -inf
      %v978 = vrot.slane %v977, 4
      %v979 = vmax.f32 %v977, %v978
      %v980 = vrot.slane %v979, 2
      %v981 = vmax.f32 %v979, %v980
      %v982 = vrot.slane %v981, 1
      %v983 = vmax.f32 %v981, %v982
      %v984 = vsel %vm796, %v944, -inf
      %v985 = vrot.slane %v984, 4
      %v986 = vmax.f32 %v984, %v985
      %v987 = vrot.slane %v986, 2
      %v988 = vmax.f32 %v986, %v987
      %v989 = vrot.slane %v988, 1
      %v990 = vmax.f32 %v988, %v989
      %v991 = vsel %vm796, %v945, -inf
      %v992 = vrot.slane %v991, 4
      %v993 = vmax.f32 %v991, %v992
      %v994 = vrot.slane %v993, 2
      %v995 = vmax.f32 %v993, %v994
      %v996 = vrot.slane %v995, 1
      %v997 = vmax.f32 %v995, %v996
      %v998 = vsel %vm796, %v946, -inf
      %v999 = vrot.slane %v998, 4
      %v1000 = vmax.f32 %v998, %v999
      %v1001 = vrot.slane %v1000, 2
      %v1002 = vmax.f32 %v1000, %v1001
      %v1003 = vrot.slane %v1002, 1
      %v1004 = vmax.f32 %v1002, %v1003
      %v1005 = vsel %vm796, %v947, -inf
      %v1006 = vrot.slane %v1005, 4
      %v1007 = vmax.f32 %v1005, %v1006
      %v1008 = vrot.slane %v1007, 2
      %v1009 = vmax.f32 %v1007, %v1008
      %v1010 = vrot.slane %v1009, 1
      %v1011 = vmax.f32 %v1009, %v1010
      %v1012 = vsel %vm796, %v948, -inf
      %v1013 = vrot.slane %v1012, 4
      %v1014 = vmax.f32 %v1012, %v1013
      %v1015 = vrot.slane %v1014, 2
      %v1016 = vmax.f32 %v1014, %v1015
      %v1017 = vrot.slane %v1016, 1
      %v1018 = vmax.f32 %v1016, %v1017
      %v1019 = vsel %vm796, %v949, -inf
      %v1020 = vrot.slane %v1019, 4
      %v1021 = vmax.f32 %v1019, %v1020
      %v1022 = vrot.slane %v1021, 2
      %v1023 = vmax.f32 %v1021, %v1022
      %v1024 = vrot.slane %v1023, 1
      %v1025 = vmax.f32 %v1023, %v1024
      %v1026 = vsel %vm796, %v950, -inf
      %v1027 = vrot.slane %v1026, 4
      %v1028 = vmax.f32 %v1026, %v1027
      %v1029 = vrot.slane %v1028, 2
      %v1030 = vmax.f32 %v1028, %v1029
      %v1031 = vrot.slane %v1030, 1
      %v1032 = vmax.f32 %v1030, %v1031
      %v1033 = vsel %vm796, %v951, -inf
      %v1034 = vrot.slane %v1033, 4
      %v1035 = vmax.f32 %v1033, %v1034
      %v1036 = vrot.slane %v1035, 2
      %v1037 = vmax.f32 %v1035, %v1036
      %v1038 = vrot.slane %v1037, 1
      %v1039 = vmax.f32 %v1037, %v1038
      %v1040 = vsel %vm796, %v952, -inf
      %v1041 = vrot.slane %v1040, 4
      %v1042 = vmax.f32 %v1040, %v1041
      %v1043 = vrot.slane %v1042, 2
      %v1044 = vmax.f32 %v1042, %v1043
      %v1045 = vrot.slane %v1044, 1
      %v1046 = vmax.f32 %v1044, %v1045
      %v1047 = vsel %vm796, %v953, -inf
      %v1048 = vrot.slane %v1047, 4
      %v1049 = vmax.f32 %v1047, %v1048
      %v1050 = vrot.slane %v1049, 2
      %v1051 = vmax.f32 %v1049, %v1050
      %v1052 = vrot.slane %v1051, 1
      %v1053 = vmax.f32 %v1051, %v1052
      %v1054 = vsel %vm796, %v954, -inf
      %v1055 = vrot.slane %v1054, 4
      %v1056 = vmax.f32 %v1054, %v1055
      %v1057 = vrot.slane %v1056, 2
      %v1058 = vmax.f32 %v1056, %v1057
      %v1059 = vrot.slane %v1058, 1
      %v1060 = vmax.f32 %v1058, %v1059
      %v1061 = vsel %vm796, %v955, -inf
      %v1062 = vrot.slane %v1061, 4
      %v1063 = vmax.f32 %v1061, %v1062
      %v1064 = vrot.slane %v1063, 2
      %v1065 = vmax.f32 %v1063, %v1064
      %v1066 = vrot.slane %v1065, 1
      %v1067 = vmax.f32 %v1065, %v1066
      %s1068 = smul.u32 %s23, 8
      %s1069 = smul.addr %s1068, 4
      %s1070 = scalar_lea.vmem %s5, %s1069
      %v1071 = vld [vmem:[%s1070] sm:$0xf]
      %v1072 = vld [vmem:[%s1070 + $0x4] sm:$0xf]
      %v1073 = vld [vmem:[%s1070 + $0x8] sm:$0xf]
      %v1074 = vld [vmem:[%s1070 + $0xc] sm:$0xf]
      %v1075 = vld [vmem:[%s1070 + $0x10] sm:$0xf]
      %v1076 = vld [vmem:[%s1070 + $0x14] sm:$0xf]
      %v1077 = vld [vmem:[%s1070 + $0x18] sm:$0xf]
      %v1078 = vld [vmem:[%s1070 + $0x1c] sm:$0xf]
      %v1079 = vpack.c.bf16 %v962, %v962
      %v1080 = vpack.c.bf16 %v969, %v969
      %v1081 = vpack.c.bf16 %v976, %v976
      %v1082 = vpack.c.bf16 %v983, %v983
      %v1083 = vpack.c.bf16 %v990, %v990
      %v1084 = vpack.c.bf16 %v997, %v997
      %v1085 = vpack.c.bf16 %v1004, %v1004
      %v1086 = vpack.c.bf16 %v1011, %v1011
      %v1087 = vpack.c.bf16 %v1018, %v1018
      %v1088 = vpack.c.bf16 %v1025, %v1025
      %v1089 = vpack.c.bf16 %v1032, %v1032
      %v1090 = vpack.c.bf16 %v1039, %v1039
      %v1091 = vpack.c.bf16 %v1046, %v1046
      %v1092 = vpack.c.bf16 %v1053, %v1053
      %v1093 = vpack.c.bf16 %v1060, %v1060
      %v1094 = vpack.c.bf16 %v1067, %v1067
      %v1111 = vunpack.c.l.b16 %v1079
      %v1112 = vunpack.c.l.b16 %v1080
      %v1113 = vunpack.c.l.b16 %v1081
      %v1114 = vunpack.c.l.b16 %v1082
      %v1115 = vunpack.c.l.b16 %v1083
      %v1116 = vunpack.c.l.b16 %v1084
      %v1117 = vunpack.c.l.b16 %v1085
      %v1118 = vunpack.c.l.b16 %v1086
      %v1119 = vunpack.c.l.b16 %v1087
      %v1120 = vunpack.c.l.b16 %v1088
      %v1121 = vunpack.c.l.b16 %v1089
      %v1122 = vunpack.c.l.b16 %v1090
      %v1123 = vunpack.c.l.b16 %v1091
      %v1124 = vunpack.c.l.b16 %v1092
      %v1125 = vunpack.c.l.b16 %v1093
      %v1126 = vunpack.c.l.b16 %v1094
      %vm1127 = vcmask 1041409
      %v1128 = vsel %vm1127, %v1112, %v1111
      %vm1129 = vcmask 1042434
      %v1130 = vsel %vm1129, %v1113, %v1128
      %vm1131 = vcmask 1043459
      %v1132 = vsel %vm1131, %v1114, %v1130
      %vm1133 = vcmask 1044484
      %v1134 = vsel %vm1133, %v1115, %v1132
      %vm1135 = vcmask 1045509
      %v1136 = vsel %vm1135, %v1116, %v1134
      %vm1137 = vcmask 1046534
      %v1138 = vsel %vm1137, %v1117, %v1136
      %vm1139 = vcmask 1047559
      %v1140 = vsel %vm1139, %v1118, %v1138
      %v1141 = vsel %vm1127, %v1120, %v1119
      %v1142 = vsel %vm1129, %v1121, %v1141
      %v1143 = vsel %vm1131, %v1122, %v1142
      %v1144 = vsel %vm1133, %v1123, %v1143
      %v1145 = vsel %vm1135, %v1124, %v1144
      %v1146 = vsel %vm1137, %v1125, %v1145
      %v1147 = vsel %vm1139, %v1126, %v1146
      %v1148 = vpack.c.b16 %v1147, %v1140
      %v1157 = vunpack.c.l.b16 %v1071
      %v1158 = vunpack.c.l.b16 %v1072
      %v1159 = vunpack.c.l.b16 %v1073
      %v1160 = vunpack.c.l.b16 %v1074
      %v1161 = vunpack.c.l.b16 %v1075
      %v1162 = vunpack.c.l.b16 %v1076
      %v1163 = vunpack.c.l.b16 %v1077
      %v1164 = vunpack.c.l.b16 %v1078
      %v1165 = vpack.c.b16 %v1158, %v1157
      %v1166 = vpack.c.b16 %v1160, %v1159
      %v1167 = vpack.c.b16 %v1162, %v1161
      %v1168 = vpack.c.b16 %v1164, %v1163
      %v1174 = vsel %vm796, %v1148, 0
      %1176 = vmatprep.subr.bf16.mxu0 0
      %1177 = vmatpush1.bf16.msra.mxu0 %v1165
      %1178 = vmatprep.subr.bf16.mxu0 0
      %1179 = vmatpush1.bf16.msra.mxu0 %v1166
      %1180 = vmatprep.subr.bf16.mxu0 0
      %1181 = vmatpush1.bf16.msra.mxu0 %v1167
      %1182 = vmatprep.subr.bf16.mxu0 0
      %1183 = vmatpush1.bf16.msra.mxu0 %v1168
      %1184 = vmatprep.subr.bf16.mxu0 0
      %1185 = vmatpush1.bf16.msra.mxu0 0
      %1186 = vmatprep.subr.bf16.mxu0 0
      %1187 = vmatpush1.bf16.msra.mxu0 0
      %1188 = vmatprep.subr.bf16.mxu0 0
      %1189 = vmatpush1.bf16.msra.mxu0 0
      %1190 = vmatprep.subr.bf16.mxu0 0
      %1191 = vmatpush1.bf16.msra.mxu0 0
      %1192 = vmatprep.subr.bf16.mxu0 0
      %1193 = vmatpush1.bf16.msra.mxu0 0
      %1194 = vmatprep.subr.bf16.mxu0 0
      %1195 = vmatpush1.bf16.msra.mxu0 0
      %1196 = vmatprep.subr.bf16.mxu0 0
      %1197 = vmatpush1.bf16.msra.mxu0 0
      %1198 = vmatprep.subr.bf16.mxu0 0
      %1199 = vmatpush1.bf16.msra.mxu0 0
      %1200 = vmatprep.subr.bf16.mxu0 0
      %1201 = vmatpush1.bf16.msra.mxu0 0
      %1202 = vmatprep.subr.bf16.mxu0 0
      %1203 = vmatpush1.bf16.msra.mxu0 0
      %1204 = vmatprep.subr.bf16.mxu0 0
      %1205 = vmatpush1.bf16.msra.mxu0 0
      %1206 = vmatprep.subr.bf16.mxu0 0
      %1207 = vmatpush1.bf16.msra.mxu0 0
      %1208 = vmatprep.mubr.bf16.mxu0 0
      %1209 = vmatmul.mubr.bf16.gmra.mrb[0].mxu0 %v1174
      %v1210 = vpop.f32.mrb[0].mxu0
      %v1211 = vadd.f32 0.0, %v1210
      %v1212 = vpop.f32.mrb[0].mxu0
      %v1213 = vpop.f32.mrb[0].mxu0
      %v1214 = vadd.f32 0.0, %v1213
      %v1215 = vpop.f32.mrb[0].mxu0
      %1216 = vdwg.mxu0
      %s1217 = smul.u32 %s23, 2
      %s1218 = scalar_lea.vmem %s6, %s1217
      %v1219 = vld [vmem:[%s1218] sm:$0x3]
      %v1220 = vsel %vm796, %v1211, 0.0
      %v1221 = vsel %vm796, %v1214, 0.0
      %v1222 = vadd.f32 %v1220, %v1221
      %v1223 = vrot.slane %v1222, 4
      %v1224 = vadd.f32 %v1222, %v1223
      %v1225 = vrot.slane %v1224, 2
      %v1226 = vadd.f32 %v1224, %v1225
      %v1227 = vrot.slane %v1226, 1
      %v1228 = vadd.f32 %v1226, %v1227
      %v1229 = vmul.f32 %v1211, %v1211
      %v1230 = vmul.f32 %v1214, %v1214
      %v1231 = vsel %vm796, %v1229, 0.0
      %v1232 = vsel %vm796, %v1230, 0.0
      %v1233 = vadd.f32 %v1231, %v1232
      %v1234 = vrot.slane %v1233, 4
      %v1235 = vadd.f32 %v1233, %v1234
      %v1236 = vrot.slane %v1235, 2
      %v1237 = vadd.f32 %v1235, %v1236
      %v1238 = vrot.slane %v1237, 1
      %v1239 = vadd.f32 %v1237, %v1238
      %v1240 = vmul.f32 %v1228, 0.0625
      %v1241 = vmul.f32 %v1239, 0.0625
      %v1242 = vmul.f32 %v1240, %v1240
      %v1243 = vsub.f32 %v1241, %v1242
      %v1244 = vmax.f32 %v1243, 0.0
      %v1245 = vadd.f32 %v1244, 1e-05
      %v1246 = vrsqrt.pop %v1245
      %v1247 = vmul.f32 %v1219, %v1246
      %v1248 = vmul.f32 %v1240, %v1247
      %v1250 = vrot.slane %v1248, 7
      %v1252 = vsub.f32 %v1219, %v1250
      %v1253 = vlaneseq
      %v1254 = vshrl.u32 %v1253, 7
      %v1255 = vsub.s32 0, %v1254
      %v1256 = vrot.slane %v1247, %v1255
      %v1257 = vmul.f32 %v1211, %v1256
      %v1258 = vmul.f32 %v1214, %v1256
      %v1259 = vlaneseq
      %v1260 = vshrl.u32 %v1259, 7
      %v1261 = vsub.s32 1, %v1260
      %v1262 = vrot.slane %v1252, %v1261
      %v1263 = vadd.f32 %v1257, %v1262
      %v1264 = vadd.f32 %v1258, %v1262
      %v1265 = vmax.f32 %v1263, 0.0
      %v1266 = vmax.f32 %v1264, 0.0
      %p1267 = scmp.eq.s32.totalorder %s23, 0
      // Predicated region
      $region49: #{tpu_custom_call.1} parent=47 // pred_check
        %p1268 = pneg %p1267
      $region50: #{tpu_custom_call.1} parent=47 // pred_check_branch
        %1270 = sbr.rel (%p1268) target = $region52
      $region51: #{tpu_custom_call.1} parent=47 // pred_region
        %1271 = vst.msk [vmem:[#allocation2] sm:$0xff] %vm796, %v1265
        %1272 = vst.msk [vmem:[#allocation2 + $0x8] sm:$0xff] %vm796, %v1266
      $region52: #{tpu_custom_call.1} parent=47 // pred_fallthru
        _
      %p1273 = scmp.ne.s32.totalorder %s23, 0
      // Predicated region
      $region53: #{tpu_custom_call.1} parent=47 // pred_check
        %p1274 = pneg %p1273
      $region54: #{tpu_custom_call.1} parent=47 // pred_check_branch
        %1276 = sbr.rel (%p1274) target = $region56
      $region55: #{tpu_custom_call.1} parent=47 // pred_region
        %v1277 = vld [vmem:[#allocation2] sm:$0xff]
        %v1278 = vld [vmem:[#allocation2 + $0x8] sm:$0xff]
        %v1279 = vadd.f32 %v1277, %v1265
        %v1280 = vadd.f32 %v1278, %v1266
        %1281 = vst.msk [vmem:[#allocation2] sm:$0xff] %vm796, %v1279
        %1282 = vst.msk [vmem:[#allocation2 + $0x8] sm:$0xff] %vm796, %v1280
      $region56: #{tpu_custom_call.1} parent=47 // pred_fallthru
        _
      %p1283 = scmp.eq.s32.totalorder %s23, 2
      // Predicated region
      $region57: #{tpu_custom_call.1} parent=47 // pred_check
        %p1284 = pneg %p1283
      $region58: #{tpu_custom_call.1} parent=47 // pred_check_branch
        %1286 = sbr.rel (%p1284) target = $region60
      $region59: #{tpu_custom_call.1} parent=47 // pred_region
        %v1287 = vld [vmem:[#allocation2] sm:$0xff]
        %v1288 = vld [vmem:[#allocation2 + $0x8] sm:$0xff]
        %1289 = vxpose.xlu0.b32.start [1/16] %v1287, 128
        %1290 = vxpose.xlu0.b32.cont [2/16] %v1288, 128
        %1291 = vxpose.xlu0.b32.cont [3/16] 0.0, 128
        %1292 = vxpose.xlu0.b32.cont [4/16] 0.0, 128
        %1293 = vxpose.xlu0.b32.cont [5/16] 0.0, 128
        %1294 = vxpose.xlu0.b32.cont [6/16] 0.0, 128
        %1295 = vxpose.xlu0.b32.cont [7/16] 0.0, 128
        %1296 = vxpose.xlu0.b32.cont [8/16] 0.0, 128
        %1297 = vxpose.xlu0.b32.cont [9/16] 0.0, 128
        %1298 = vxpose.xlu0.b32.cont [10/16] 0.0, 128
        %1299 = vxpose.xlu0.b32.cont [11/16] 0.0, 128
        %1300 = vxpose.xlu0.b32.cont [12/16] 0.0, 128
        %1301 = vxpose.xlu0.b32.cont [13/16] 0.0, 128
        %1302 = vxpose.xlu0.b32.cont [14/16] 0.0, 128
        %1303 = vxpose.xlu0.b32.cont [15/16] 0.0, 128
        %1304 = vxpose.xlu0.b32.end [16/16] 0.0, 128
        %v1305 = vpop.trf.xlu0
        %v1306 = vpop.trf.xlu0
        %v1307 = vpop.trf.xlu0
        %v1308 = vpop.trf.xlu0
        %v1309 = vpop.trf.xlu0
        %v1310 = vpop.trf.xlu0
        %v1311 = vpop.trf.xlu0
        %v1312 = vpop.trf.xlu0
        %v1313 = vpop.trf.xlu0
        %v1314 = vpop.trf.xlu0
        %v1315 = vpop.trf.xlu0
        %v1316 = vpop.trf.xlu0
        %v1317 = vpop.trf.xlu0
        %v1318 = vpop.trf.xlu0
        %v1319 = vpop.trf.xlu0
        %v1320 = vpop.trf.xlu0
        %vm1321 = vcmask 130048
        %1322 = vst.msk [vmem:[%s304] sm:$0xff] %vm1321, %v1305
        %1323 = vst.msk [vmem:[%s304 + $0x8] sm:$0xff] %vm1321, %v1306
        %1324 = vst.msk [vmem:[%s304 + $0x10] sm:$0xff] %vm1321, %v1307
        %1325 = vst.msk [vmem:[%s304 + $0x18] sm:$0xff] %vm1321, %v1308
        %1326 = vst.msk [vmem:[%s304 + $0x20] sm:$0xff] %vm1321, %v1309
        %1327 = vst.msk [vmem:[%s304 + $0x28] sm:$0xff] %vm1321, %v1310
        %1328 = vst.msk [vmem:[%s304 + $0x30] sm:$0xff] %vm1321, %v1311
        %1329 = vst.msk [vmem:[%s304 + $0x38] sm:$0xff] %vm1321, %v1312
      $region60: #{tpu_custom_call.1} parent=47 // pred_fallthru
        _
      %p1330 = scmp.lt.s32.totalorder %s22, 3
      %s1331 = scalar_select %p1330, %s22, 3
      %s1332 = smul.addr %s1331, 8
      %s1333 = smul.addr %s1332, 8
      %s1334 = scalar_lea.vmem %s7, %s1333
      // Predicated region
      $region61: #{tpu_custom_call.1} parent=47 // pred_check
        %p1335 = pneg %p202
      $region62: #{tpu_custom_call.1} parent=47 // pred_check_branch
        %1337 = sbr.rel (%p1335) target = $region64
      $region63: #{tpu_custom_call.1} parent=47 // pred_region
        _
      $region64: #{tpu_custom_call.1} parent=47 // pred_fallthru
        _
    $region48: #{tpu_custom_call.1} parent=5 // pred_fallthru
      _
    %p1338 = scmp.le.s32.totalorder 2, %s13
    // Predicated region
    $region65: #{tpu_custom_call.1} parent=5 // pred_check
      %p1339 = pneg %p1338
    $region66: #{tpu_custom_call.1} parent=5 // pred_check_branch
      %1341 = sbr.rel (%p1339) target = $region68
    $region67: #{tpu_custom_call.1} parent=5 // pred_region
      %s1342 = ssub.s32 %s13, 2
      // Predicated region
      $region69: #{tpu_custom_call.1} parent=67 // pred_check
        %p1343 = pneg %p208
      $region70: #{tpu_custom_call.1} parent=67 // pred_check_branch
        %1345 = sbr.rel (%p1343) target = $region72
      $region71: #{tpu_custom_call.1} parent=67 // pred_region
        %p1346 = scmp.lt.s32.totalorder %s24, 3
        %s1347 = scalar_select %p1346, %s24, 3
        %s1348 = smul.addr %s1347, 8
        %s1349 = smul.addr %s1348, 8
        %s1350 = scalar_lea.vmem %s7, %s1349
      $region72: #{tpu_custom_call.1} parent=67 // pred_fallthru
        _
    $region68: #{tpu_custom_call.1} parent=5 // pred_fallthru
      _
  $region6: #{tpu_custom_call.1} parent=0 // loop_footer
    %s17 = sadd.s32 1, %s13
  $region7: #{tpu_custom_call.1} parent=0 // loop_footer_branch
    %12 = sbr.rel target = $region3
  $region8: #{tpu_custom_call.1} parent=0 // loop_exit
    _

</llo_original>
